<compile_context>
chip_gen: v7x
topology: tpu7x:2x2x1
jax: 0.10.0
libtpu: 0.0.40
codegen_flags: <defaults>
</compile_context>

<pallas_src>
import jax
import jax.numpy as jnp
from jax.experimental import pallas as pl
from jax.experimental.pallas import tpu as pltpu

_LANE = 128  # TPU lane width; also the hidden width of the synthetic nets.


# ----------------------------------------------------------------------------
# Fused Pallas kernel: encoder -> reparameterization -> generator
# ----------------------------------------------------------------------------
def vae_gan_kernel(x_ref, epsc_ref,
                   w_enc_ref, w_cenc_ref, b_enc_ref,
                   w_ih_ref, b_head_ref,
                   w_zc_ref, b_g1_ref,
                   w_g2_ref, b_g2_ref,
                   img_ref, head_ref):
    hid = w_enc_ref.shape[1]  # == _LANE (asserted in the wrapper)
    bf16 = jnp.bfloat16

    # -- MXU pass 1: encoder hidden = relu(x @ We_x + c @ We_c + b_e) ---------
    # x path is K=1024 (lane aligned); the c path rides the [eps|c|0] slab via
    # w_cenc whose eps/pad rows are exactly zero.  bf16 weights, f32 acc.
    h = jnp.dot(x_ref[...].astype(bf16), w_enc_ref[...],
                preferred_element_type=jnp.float32)
    h = h + jnp.dot(epsc_ref[...].astype(bf16), w_cenc_ref[...],
                    preferred_element_type=jnp.float32)
    h = jnp.maximum(h + b_enc_ref[...], 0.0)                 # == inject_info

    # -- MXU pass 2: inject path + both VAE heads over the same K=Hid LHS -----
    # column layout of w_ih: [ Wg_i (hid) | mu-block (128) | log_var-block (128) ]
    ih = jnp.dot(h.astype(bf16), w_ih_ref[...],
                 preferred_element_type=jnp.float32)
    inj = ih[:, :hid]                                        # h @ Wg_i
    head = ih[:, hid:] + b_head_ref[...]                     # [mu|0.. , lv|0..]
    head_ref[...] = head                                     # lane-dense (B,256)

    muz = head[:, :_LANE]                                    # [mu     | 0...]
    lvz = head[:, _LANE:]                                    # [log_var| 0...]

    # -- Reparameterization + c merge (f32; exp -> EUP slot, essentially free) -
    # epsc = [eps | c | 0] (wrapper-built).  exp(0.5*0) == 1, so
    #   zc = [mu + exp(0.5*lv)*eps | c | 0] == [gen_z | c | 0]
    zc = muz + jnp.exp(0.5 * lvz) * epsc_ref[...]

    # -- MXU pass 3: generator layer 1 = relu(z@Wg_z + c@Wg_c + h@Wg_i + b) ---
    g = jnp.dot(zc.astype(bf16), w_zc_ref[...],
                preferred_element_type=jnp.float32)
    g = jnp.maximum(g + inj + b_g1_ref[...], 0.0)

    # -- MXU pass 4: image = tanh(g @ Wg_2 + b_g2) -----------------------------
    img = jnp.dot(g.astype(bf16), w_g2_ref[...],
                  preferred_element_type=jnp.float32)
    img_ref[...] = jnp.tanh(img + b_g2_ref[...])


# ----------------------------------------------------------------------------
# Wrapper (mirrors VaeGanFineTune.forward(real_img, real_c, sync))
# ----------------------------------------------------------------------------
def vae_gan_fine_tune_forward(real_img, real_c, params, eps):
    B, C, H, W = real_img.shape
    Din = C * H * W
    Cdim = real_c.shape[1]
    Z = eps.shape[1]
    Hid = params["w_enc"].shape[1]
    assert Hid == _LANE and Z + Cdim <= _LANE
    assert Din % _LANE == 0  # lane-dense image slab. TODO(synk): pad otherwise.

    x_flat = real_img.reshape(B, Din).astype(jnp.float32)   # == .view(B, -1)
    # [eps | c | 0] padded to one 128-lane vreg: feeds BOTH the encoder c-path
    # and the reparameterization, so no ragged concat / ragged-K matmul exists.
    epsc = jnp.concatenate(
        [eps, real_c, jnp.zeros((B, _LANE - Z - Cdim), jnp.float32)], axis=-1)

    # Pad batch to a multiple of 8 sublanes (f32 vreg is 8x128).
    Bp = max(8, -(-B // 8) * 8)
    if Bp != B:
        x_flat = jnp.pad(x_flat, ((0, Bp - B), (0, 0)))
        epsc = jnp.pad(epsc, ((0, Bp - B), (0, 0)))
    # TODO(synk): for throughput, tile the batch on a grid (128/256-row M tiles)
    # once real batch sizes are in play; at Bp=8 the kernel is launch/DMA bound.

    ins = (x_flat, epsc,
           params["w_enc"], params["w_cenc"], params["b_enc"],
           params["w_ih"], params["b_head"],
           params["w_zc"], params["b_g1"],
           params["w_g2"], params["b_g2"])
    out_shape = (jax.ShapeDtypeStruct((Bp, Din), jnp.float32),        # image
                 jax.ShapeDtypeStruct((Bp, 2 * _LANE), jnp.float32))  # [mu|0|lv|0]

    flops = 2 * Bp * (Din * Hid              # pass 1a: x @ We_x
                      + _LANE * Hid          # pass 1b: [eps|c|0] @ We_c(pad)
                      + Hid * (Hid + 2 * _LANE)  # pass 2: inject + heads
                      + _LANE * Hid          # pass 3: zc @ Wg_zc
                      + Hid * Din)           # pass 4: g @ Wg_2
    in_bytes = sum(int(a.size) * a.dtype.itemsize for a in ins)
    out_bytes = Bp * (Din + 2 * _LANE) * 4
    # Explicit VMEM budget: actual resident footprint x4 (double-buffering /
    # compiler scratch headroom), clamped to [4 MiB, 64 MiB] (v7x physical).
    vmem_limit = int(min(64 << 20, max(4 << 20, 4 * (in_bytes + out_bytes))))

    vmem = pl.BlockSpec(memory_space=pltpu.MemorySpace.VMEM)
    img_flat, head = pl.pallas_call(
        vae_gan_kernel,
        out_shape=out_shape,
        in_specs=[vmem] * len(ins),
        out_specs=(vmem, vmem),
        compiler_params=pltpu.CompilerParams(vmem_limit_bytes=vmem_limit),
        cost_estimate=pl.CostEstimate(
            flops=flops,
            transcendentals=Bp * (_LANE + Din),
            bytes_accessed=in_bytes + out_bytes),
    )(*ins)

    reconstructed_img = img_flat[:B].reshape(B, C, H, W)   # back to NCHW
    mu = head[:B, :Z]
    log_var = head[:B, _LANE:_LANE + Z]
    return reconstructed_img, mu, log_var


# ----------------------------------------------------------------------------
# Deterministic parameter construction (raw + kernel-fused layouts)
# ----------------------------------------------------------------------------
def _validate_fused_params(params, Cdim, Hid, Z):
    """The zc / epsc fusion tricks require these pads to be EXACTLY zero."""
    def all_zero(a):
        return bool(jnp.all(a == 0))
    assert all_zero(params["w_cenc"][:Z]), "eps rows of w_cenc must be zero"
    assert all_zero(params["w_cenc"][Z + Cdim:]), "pad rows of w_cenc must be zero"
    assert all_zero(params["w_ih"][:, Hid + Z:Hid + _LANE]), "mu pad cols nonzero"
    assert all_zero(params["w_ih"][:, Hid + _LANE + Z:]), "log_var pad cols nonzero"
    assert all_zero(params["b_head"][:, Z:_LANE]), "mu pad bias nonzero"
    assert all_zero(params["b_head"][:, _LANE + Z:]), "log_var pad bias nonzero"
    assert all_zero(params["w_zc"][Z + Cdim:]), "pad rows of w_zc must be zero"


def init_params(key, Din, Cdim, Hid, Z):
    assert Hid == _LANE and Z + Cdim <= _LANE
    ks = jax.random.split(key, 8)
    s = lambda fan_in: 1.0 / jnp.sqrt(jnp.float32(fan_in))
    raw = {
        "enc_w1":  jax.random.normal(ks[0], (Din, Hid), jnp.float32) * s(Din),
        "enc_wc":  jax.random.normal(ks[1], (Cdim, Hid), jnp.float32) * s(Cdim),
        "enc_b1":  jnp.zeros((1, Hid), jnp.float32),
        "enc_wmu": jax.random.normal(ks[2], (Hid, Z), jnp.float32) * s(Hid),
        "enc_bmu": jnp.zeros((1, Z), jnp.float32),
        "enc_wlv": jax.random.normal(ks[3], (Hid, Z), jnp.float32) * s(Hid),
        "enc_blv": jnp.zeros((1, Z), jnp.float32),
        "gen_w1":  jax.random.normal(ks[4], (Z, Hid), jnp.float32) * s(Z),
        "gen_wc":  jax.random.normal(ks[5], (Cdim, Hid), jnp.float32) * s(Cdim),
        "gen_wi":  jax.random.normal(ks[6], (Hid, Hid), jnp.float32) * s(Hid),
        "gen_b1":  jnp.zeros((1, Hid), jnp.float32),
        "gen_w2":  jax.random.normal(ks[7], (Hid, Din), jnp.float32) * s(Hid),
        "gen_b2":  jnp.zeros((1, Din), jnp.float32),
    }

    # --- kernel-fused layouts (built ONCE here, not per call) -----------------
    wdt = jnp.bfloat16   # MXU weights in bf16; f32 accumulation in-kernel.

    # Encoder x-path: K = Din (lane-aligned, no concat with c anymore).
    w_enc = raw["enc_w1"].astype(wdt)
    # Encoder c-path folded onto the [eps | c | 0] slab: rows Z..Z+Cdim carry
    # enc_wc, rows 0..Z (eps) and Z+Cdim..128 (pad) stay exactly zero.
    w_cenc = jnp.zeros((_LANE, Hid), jnp.float32)
    w_cenc = w_cenc.at[Z:Z + Cdim].set(raw["enc_wc"])
    w_cenc = w_cenc.astype(wdt)

    # Inject path + mu/log_var heads fused over the same K=Hid LHS.
    # Padding columns MUST stay zero (the exp(0.5*0)==1 / mu-pad==0 trick).
    w_ih = jnp.zeros((Hid, Hid + 2 * _LANE), jnp.float32)
    w_ih = w_ih.at[:, :Hid].set(raw["gen_wi"])
    w_ih = w_ih.at[:, Hid:Hid + Z].set(raw["enc_wmu"])
    w_ih = w_ih.at[:, Hid + _LANE:Hid + _LANE + Z].set(raw["enc_wlv"])
    w_ih = w_ih.astype(wdt)
    b_head = jnp.zeros((1, 2 * _LANE), jnp.float32)
    b_head = b_head.at[:, :Z].set(raw["enc_bmu"])
    b_head = b_head.at[:, _LANE:_LANE + Z].set(raw["enc_blv"])

    # Generator layer 1 consumes zc = [gen_z | c | 0] (128 lanes).
    w_zc = jnp.zeros((_LANE, Hid), jnp.float32)
    w_zc = w_zc.at[:Z].set(raw["gen_w1"])
    w_zc = w_zc.at[Z:Z + Cdim].set(raw["gen_wc"])
    w_zc = w_zc.astype(wdt)

    params = {
        "w_enc": w_enc, "w_cenc": w_cenc, "b_enc": raw["enc_b1"],
        "w_ih": w_ih, "b_head": b_head,
        "w_zc": w_zc, "b_g1": raw["gen_b1"],
        "w_g2": raw["gen_w2"].astype(wdt), "b_g2": raw["gen_b2"],
    }
    _validate_fused_params(params, Cdim, Hid, Z)
    return params, raw


# Pure-JAX reference in the original (unfused) form, for correctness checking.
# Numerics are matched to the kernel: bf16 weights + bf16-cast activations into
# each dot, f32 accumulation, f32 epilogue.  (The kernel deliberately trades
# f32-weight precision for ~2x less weight DMA; preferred_element_type only
# controls accumulation, not the input rounding.)
def reference_forward(real_img, real_c, raw, eps, weight_dtype=jnp.bfloat16):
    B = real_img.shape[0]
    x = real_img.reshape(B, -1)

    def dot(a, w):
        return jnp.dot(a.astype(weight_dtype), w.astype(weight_dtype),
                       preferred_element_type=jnp.float32)

    h = jnp.maximum(dot(x, raw["enc_w1"]) + dot(real_c, raw["enc_wc"])
                    + raw["enc_b1"], 0.0)
    mu = dot(h, raw["enc_wmu"]) + raw["enc_bmu"]
    lv = dot(h, raw["enc_wlv"]) + raw["enc_blv"]
    z = mu + jnp.exp(0.5 * lv) * eps
    g = jnp.maximum(dot(z, raw["gen_w1"]) + dot(real_c, raw["gen_wc"])
                    + dot(h, raw["gen_wi"]) + raw["gen_b1"], 0.0)
    img = jnp.tanh(dot(g, raw["gen_w2"]) + raw["gen_b2"])
    return img.reshape(real_img.shape), mu, lv


# ----------------------------------------------------------------------------
if __name__ == "__main__":
    B, C, H, W = 2, 4, 16, 16      # small NCHW image, like PyTorch conv input
    Cdim = 8                       # conditioning dim (real_c)
    Hid = 128                      # encoder/generator hidden width
    Z = 32                         # latent dim
    Din = C * H * W

    key = jax.random.PRNGKey(0)
    k_img, k_c, k_eps, k_par = jax.random.split(key, 4)

    real_img = jax.random.normal(k_img, (B, C, H, W), jnp.float32)
    real_c = jax.random.normal(k_c, (B, Cdim), jnp.float32)
    eps = jax.random.normal(k_eps, (B, Z), jnp.float32)   # fixed reparam noise
    params, raw = init_params(k_par, Din, Cdim, Hid, Z)

    fwd = jax.jit(lambda img, c, e: vae_gan_fine_tune_forward(img, c, params, e))
    recon, mu, log_var = fwd(real_img, real_c, eps)
    jax.block_until_ready((recon, mu, log_var))

    assert recon.shape == (B, C, H, W)
    assert mu.shape == (B, Z) and log_var.shape == (B, Z)

    # Correctness check against the unfused pure-JAX reference (same bf16
    # weight / f32 accumulation numerics as the kernel).
    r_img, r_mu, r_lv = reference_forward(real_img, real_c, raw, eps)
    for got, want in ((recon, r_img), (mu, r_mu), (log_var, r_lv)):
        err = float(jnp.max(jnp.abs(got - want)))
        assert err < 2e-2, f"kernel/reference mismatch: max abs err {err}"

    print("KERNEL_OK")
</pallas_src>

<mosaic_0001>
module attributes {stable_mosaic.version = 11 : i64} {
  func.func @vae_gan_kernel(%arg0: memref<8x1024xf32, #tpu.memory_space<vmem>>, %arg1: memref<8x128xf32, #tpu.memory_space<vmem>>, %arg2: memref<1024x128xbf16, #tpu.memory_space<vmem>>, %arg3: memref<128x128xbf16, #tpu.memory_space<vmem>>, %arg4: memref<1x128xf32, #tpu.memory_space<vmem>>, %arg5: memref<128x384xbf16, #tpu.memory_space<vmem>>, %arg6: memref<1x256xf32, #tpu.memory_space<vmem>>, %arg7: memref<128x128xbf16, #tpu.memory_space<vmem>>, %arg8: memref<1x128xf32, #tpu.memory_space<vmem>>, %arg9: memref<128x1024xbf16, #tpu.memory_space<vmem>>, %arg10: memref<1x1024xf32, #tpu.memory_space<vmem>>, %arg11: memref<8x1024xf32, #tpu.memory_space<vmem>>, %arg12: memref<8x256xf32, #tpu.memory_space<vmem>>) attributes {dimension_semantics = [], scalar_prefetch = 0 : i64, scratch_operands = 0 : i64, tpu.core_type = #tpu.core_type<tc>} {
    %c0 = arith.constant 0 : index
    %c0_0 = arith.constant 0 : index
    %0 = vector.load %arg0[%c0, %c0_0] : memref<8x1024xf32, #tpu.memory_space<vmem>>, vector<8x1024xf32>
    %1 = arith.truncf %0 : vector<8x1024xf32> to vector<8x1024xbf16>
    %c0_1 = arith.constant 0 : index
    %c0_2 = arith.constant 0 : index
    %2 = vector.load %arg2[%c0_1, %c0_2] : memref<1024x128xbf16, #tpu.memory_space<vmem>>, vector<1024x128xbf16>
    %cst = arith.constant dense<0.000000e+00> : vector<8x128xf32>
    %3 = tpu.matmul %1, %2, %cst {dimension_numbers = #tpu.dot_dimension_numbers<[1], [0], [0], [1], [0, 0, 1, 1], [], []>} : vector<8x1024xbf16>, vector<1024x128xbf16>, vector<8x128xf32> -> vector<8x128xf32>
    %c0_3 = arith.constant 0 : index
    %c0_4 = arith.constant 0 : index
    %4 = vector.load %arg1[%c0_3, %c0_4] : memref<8x128xf32, #tpu.memory_space<vmem>>, vector<8x128xf32>
    %5 = arith.truncf %4 : vector<8x128xf32> to vector<8x128xbf16>
    %c0_5 = arith.constant 0 : index
    %c0_6 = arith.constant 0 : index
    %6 = vector.load %arg3[%c0_5, %c0_6] : memref<128x128xbf16, #tpu.memory_space<vmem>>, vector<128x128xbf16>
    %cst_7 = arith.constant dense<0.000000e+00> : vector<8x128xf32>
    %7 = tpu.matmul %5, %6, %cst_7 {dimension_numbers = #tpu.dot_dimension_numbers<[1], [0], [0], [1], [0, 0, 1, 1], [], []>} : vector<8x128xbf16>, vector<128x128xbf16>, vector<8x128xf32> -> vector<8x128xf32>
    %8 = arith.addf %3, %7 : vector<8x128xf32>
    %c0_8 = arith.constant 0 : index
    %c0_9 = arith.constant 0 : index
    %9 = vector.load %arg4[%c0_8, %c0_9] : memref<1x128xf32, #tpu.memory_space<vmem>>, vector<1x128xf32>
    %10 = vector.broadcast %9 : vector<1x128xf32> to vector<8x128xf32>
    %11 = arith.addf %8, %10 : vector<8x128xf32>
    %cst_10 = arith.constant 0.000000e+00 : f32
    %12 = vector.broadcast %cst_10 : f32 to vector<8x128xf32>
    %13 = arith.maximumf %11, %12 : vector<8x128xf32>
    %14 = arith.truncf %13 : vector<8x128xf32> to vector<8x128xbf16>
    %c0_11 = arith.constant 0 : index
    %c0_12 = arith.constant 0 : index
    %15 = vector.load %arg5[%c0_11, %c0_12] : memref<128x384xbf16, #tpu.memory_space<vmem>>, vector<128x384xbf16>
    %cst_13 = arith.constant dense<0.000000e+00> : vector<8x384xf32>
    %16 = tpu.matmul %14, %15, %cst_13 {dimension_numbers = #tpu.dot_dimension_numbers<[1], [0], [0], [1], [0, 0, 1, 1], [], []>} : vector<8x128xbf16>, vector<128x384xbf16>, vector<8x384xf32> -> vector<8x384xf32>
    %17 = vector.extract_strided_slice %16 {offsets = [0, 0], sizes = [8, 128], strides = [1, 1]} : vector<8x384xf32> to vector<8x128xf32>
    %18 = vector.extract_strided_slice %16 {offsets = [0, 128], sizes = [8, 256], strides = [1, 1]} : vector<8x384xf32> to vector<8x256xf32>
    %c0_14 = arith.constant 0 : index
    %c0_15 = arith.constant 0 : index
    %19 = vector.load %arg6[%c0_14, %c0_15] : memref<1x256xf32, #tpu.memory_space<vmem>>, vector<1x256xf32>
    %20 = vector.broadcast %19 : vector<1x256xf32> to vector<8x256xf32>
    %21 = arith.addf %18, %20 : vector<8x256xf32>
    %c0_16 = arith.constant 0 : index
    %c0_17 = arith.constant 0 : index
    %22 = vector.load %arg12[%c0_16, %c0_17] : memref<8x256xf32, #tpu.memory_space<vmem>>, vector<8x256xf32>
    tpu.vector_store %arg12[%c0_16, %c0_17], %21 {strides = array<i32>} : memref<8x256xf32, #tpu.memory_space<vmem>>, vector<8x256xf32>,
    %23 = vector.extract_strided_slice %21 {offsets = [0, 0], sizes = [8, 128], strides = [1, 1]} : vector<8x256xf32> to vector<8x128xf32>
    %24 = vector.extract_strided_slice %21 {offsets = [0, 128], sizes = [8, 128], strides = [1, 1]} : vector<8x256xf32> to vector<8x128xf32>
    %cst_18 = arith.constant 5.000000e-01 : f32
    %25 = vector.broadcast %cst_18 : f32 to vector<8x128xf32>
    %26 = arith.mulf %25, %24 : vector<8x128xf32>
    %27 = math.exp %26 : vector<8x128xf32>
    %c0_19 = arith.constant 0 : index
    %c0_20 = arith.constant 0 : index
    %28 = vector.load %arg1[%c0_19, %c0_20] : memref<8x128xf32, #tpu.memory_space<vmem>>, vector<8x128xf32>
    %29 = arith.mulf %27, %28 : vector<8x128xf32>
    %30 = arith.addf %23, %29 : vector<8x128xf32>
    %31 = arith.truncf %30 : vector<8x128xf32> to vector<8x128xbf16>
    %c0_21 = arith.constant 0 : index
    %c0_22 = arith.constant 0 : index
    %32 = vector.load %arg7[%c0_21, %c0_22] : memref<128x128xbf16, #tpu.memory_space<vmem>>, vector<128x128xbf16>
    %cst_23 = arith.constant dense<0.000000e+00> : vector<8x128xf32>
    %33 = tpu.matmul %31, %32, %cst_23 {dimension_numbers = #tpu.dot_dimension_numbers<[1], [0], [0], [1], [0, 0, 1, 1], [], []>} : vector<8x128xbf16>, vector<128x128xbf16>, vector<8x128xf32> -> vector<8x128xf32>
    %34 = arith.addf %33, %17 : vector<8x128xf32>
    %c0_24 = arith.constant 0 : index
    %c0_25 = arith.constant 0 : index
    %35 = vector.load %arg8[%c0_24, %c0_25] : memref<1x128xf32, #tpu.memory_space<vmem>>, vector<1x128xf32>
    %36 = vector.broadcast %35 : vector<1x128xf32> to vector<8x128xf32>
    %37 = arith.addf %34, %36 : vector<8x128xf32>
    %cst_26 = arith.constant 0.000000e+00 : f32
    %38 = vector.broadcast %cst_26 : f32 to vector<8x128xf32>
    %39 = arith.maximumf %37, %38 : vector<8x128xf32>
    %40 = arith.truncf %39 : vector<8x128xf32> to vector<8x128xbf16>
    %c0_27 = arith.constant 0 : index
    %c0_28 = arith.constant 0 : index
    %41 = vector.load %arg9[%c0_27, %c0_28] : memref<128x1024xbf16, #tpu.memory_space<vmem>>, vector<128x1024xbf16>
    %cst_29 = arith.constant dense<0.000000e+00> : vector<8x1024xf32>
    %42 = tpu.matmul %40, %41, %cst_29 {dimension_numbers = #tpu.dot_dimension_numbers<[1], [0], [0], [1], [0, 0, 1, 1], [], []>} : vector<8x128xbf16>, vector<128x1024xbf16>, vector<8x1024xf32> -> vector<8x1024xf32>
    %c0_30 = arith.constant 0 : index
    %c0_31 = arith.constant 0 : index
    %43 = vector.load %arg10[%c0_30, %c0_31] : memref<1x1024xf32, #tpu.memory_space<vmem>>, vector<1x1024xf32>
    %44 = vector.broadcast %43 : vector<1x1024xf32> to vector<8x1024xf32>
    %45 = arith.addf %42, %44 : vector<8x1024xf32>
    %46 = math.tanh %45 : vector<8x1024xf32>
    %c0_32 = arith.constant 0 : index
    %c0_33 = arith.constant 0 : index
    %47 = vector.load %arg11[%c0_32, %c0_33] : memref<8x1024xf32, #tpu.memory_space<vmem>>, vector<8x1024xf32>
    tpu.vector_store %arg11[%c0_32, %c0_33], %46 {strides = array<i32>} : memref<8x1024xf32, #tpu.memory_space<vmem>>, vector<8x1024xf32>,
    return
  }
}

</mosaic_0001>

<llo_original>
// kernel: _lambda_.1
$region0: #{_lambda_.1}
  #allocation0 [shape = 'u32[]', space=smem, size = 0x4, offset = 0x4, fixed_abs, tag = 'smem constant byte address 0x4 - core index']
  #allocation1 [shape = 'u32[144,128]{1,0:T(1,128)}', space=vmem, size = 0x12000, scoped, tag = 'internal scratch']
  %s0 = inlined_call_operand.vmem [shape: f32[8,1024], index: 0, kind: input, shape index: {}]
  %s1 = inlined_call_operand.vmem [shape: f32[8,128], index: 1, kind: input, shape index: {}]
  %s2 = inlined_call_operand.vmem [shape: bf16[1024,128], index: 2, kind: input, shape index: {}]
  %s3 = inlined_call_operand.vmem [shape: bf16[128,128], index: 3, kind: input, shape index: {}]
  %s4 = inlined_call_operand.vmem [shape: f32[1,128], index: 4, kind: input, shape index: {}, may-alias: {4,8}]
  %s5 = inlined_call_operand.vmem [shape: bf16[128,384], index: 5, kind: input, shape index: {}]
  %s6 = inlined_call_operand.vmem [shape: f32[1,256], index: 6, kind: input, shape index: {}]
  %s7 = inlined_call_operand.vmem [shape: bf16[128,128], index: 7, kind: input, shape index: {}]
  %s8 = inlined_call_operand.vmem [shape: f32[1,128], index: 8, kind: input, shape index: {}, may-alias: {4,8}]
  %s9 = inlined_call_operand.vmem [shape: bf16[128,1024], index: 9, kind: input, shape index: {}]
  %s10 = inlined_call_operand.vmem [shape: f32[1,1024], index: 10, kind: input, shape index: {}]
  %s11 = inlined_call_operand.vmem [shape: f32[8,1024], index: 11, kind: output, shape index: {0}]
  %s12 = inlined_call_operand.vmem [shape: f32[8,256], index: 12, kind: output, shape index: {1}]
  %13 = xla_tuple %s11, %s12
  %s14 = sld [smem:[#allocation0]]
  $region62: #{_lambda_.1} parent=0
    _
  %s16 = ssub.s32 1, %s14
  %s17 = scalar_select 0, %s16, %s14
  // Predicated region
  $region2: #{_lambda_.1} parent=0 // pred_check
    _
  $region3: #{_lambda_.1} parent=0 // pred_check_branch
    %19 = sbr.rel (0) target = $region5
  $region4: #{_lambda_.1} parent=0 // pred_region
    _
  $region5: #{_lambda_.1} parent=0 // pred_fallthru
    _
  // Predicated region
  $region6: #{_lambda_.1} parent=0 // pred_check
    _
  $region7: #{_lambda_.1} parent=0 // pred_check_branch
    %21 = sbr.rel (0) target = $region9
  $region8: #{_lambda_.1} parent=0 // pred_region
    _
  $region9: #{_lambda_.1} parent=0 // pred_fallthru
    _
  // Predicated region
  $region10: #{_lambda_.1} parent=0 // pred_check
    _
  $region11: #{_lambda_.1} parent=0 // pred_check_branch
    %23 = sbr.rel (0) target = $region13
  $region12: #{_lambda_.1} parent=0 // pred_region
    _
  $region13: #{_lambda_.1} parent=0 // pred_fallthru
    _
  // Predicated region
  $region14: #{_lambda_.1} parent=0 // pred_check
    _
  $region15: #{_lambda_.1} parent=0 // pred_check_branch
    %25 = sbr.rel (0) target = $region17
  $region16: #{_lambda_.1} parent=0 // pred_region
    _
  $region17: #{_lambda_.1} parent=0 // pred_fallthru
    _
  // Predicated region
  $region18: #{_lambda_.1} parent=0 // pred_check
    _
  $region19: #{_lambda_.1} parent=0 // pred_check_branch
    %27 = sbr.rel (0) target = $region21
  $region20: #{_lambda_.1} parent=0 // pred_region
    _
  $region21: #{_lambda_.1} parent=0 // pred_fallthru
    _
  // Predicated region
  $region22: #{_lambda_.1} parent=0 // pred_check
    _
  $region23: #{_lambda_.1} parent=0 // pred_check_branch
    %29 = sbr.rel (0) target = $region25
  $region24: #{_lambda_.1} parent=0 // pred_region
    _
  $region25: #{_lambda_.1} parent=0 // pred_fallthru
    _
  // Predicated region
  $region26: #{_lambda_.1} parent=0 // pred_check
    _
  $region27: #{_lambda_.1} parent=0 // pred_check_branch
    %31 = sbr.rel (0) target = $region29
  $region28: #{_lambda_.1} parent=0 // pred_region
    _
  $region29: #{_lambda_.1} parent=0 // pred_fallthru
    _
  // Predicated region
  $region30: #{_lambda_.1} parent=0 // pred_check
    _
  $region31: #{_lambda_.1} parent=0 // pred_check_branch
    %33 = sbr.rel (0) target = $region33
  $region32: #{_lambda_.1} parent=0 // pred_region
    _
  $region33: #{_lambda_.1} parent=0 // pred_fallthru
    _
  // Predicated region
  $region34: #{_lambda_.1} parent=0 // pred_check
    _
  $region35: #{_lambda_.1} parent=0 // pred_check_branch
    %35 = sbr.rel (0) target = $region37
  $region36: #{_lambda_.1} parent=0 // pred_region
    _
  $region37: #{_lambda_.1} parent=0 // pred_fallthru
    _
  // Predicated region
  $region38: #{_lambda_.1} parent=0 // pred_check
    _
  $region39: #{_lambda_.1} parent=0 // pred_check_branch
    %37 = sbr.rel (0) target = $region41
  $region40: #{_lambda_.1} parent=0 // pred_region
    _
  $region41: #{_lambda_.1} parent=0 // pred_fallthru
    _
  // Predicated region
  $region42: #{_lambda_.1} parent=0 // pred_check
    _
  $region43: #{_lambda_.1} parent=0 // pred_check_branch
    %39 = sbr.rel (0) target = $region45
  $region44: #{_lambda_.1} parent=0 // pred_region
    _
  $region45: #{_lambda_.1} parent=0 // pred_fallthru
    _
  %v41 = vld [vmem:[%s0] sm:$0xff]
  %v42 = vld [vmem:[%s0 + $0x8] sm:$0xff]
  %v43 = vld [vmem:[%s0 + $0x10] sm:$0xff]
  %v44 = vld [vmem:[%s0 + $0x18] sm:$0xff]
  %v45 = vld [vmem:[%s0 + $0x20] sm:$0xff]
  %v46 = vld [vmem:[%s0 + $0x28] sm:$0xff]
  %v47 = vld [vmem:[%s0 + $0x30] sm:$0xff]
  %v48 = vld [vmem:[%s0 + $0x38] sm:$0xff]
  %v49 = vpack.c.bf16 %v41, %v41
  %v50 = vpack.c.bf16 %v42, %v42
  %v51 = vpack.c.bf16 %v43, %v43
  %v52 = vpack.c.bf16 %v44, %v44
  %v53 = vpack.c.bf16 %v45, %v45
  %v54 = vpack.c.bf16 %v46, %v46
  %v55 = vpack.c.bf16 %v47, %v47
  %v56 = vpack.c.bf16 %v48, %v48
  %v57 = vld [vmem:[%s2] sm:$0xf]
  %v58 = vld [vmem:[%s2 + $0x4] sm:$0xf]
  %v59 = vld [vmem:[%s2 + $0x8] sm:$0xf]
  %v60 = vld [vmem:[%s2 + $0xc] sm:$0xf]
  %v61 = vld [vmem:[%s2 + $0x10] sm:$0xf]
  %v62 = vld [vmem:[%s2 + $0x14] sm:$0xf]
  %v63 = vld [vmem:[%s2 + $0x18] sm:$0xf]
  %v64 = vld [vmem:[%s2 + $0x1c] sm:$0xf]
  %v65 = vld [vmem:[%s2 + $0x20] sm:$0xf]
  %v66 = vld [vmem:[%s2 + $0x24] sm:$0xf]
  %v67 = vld [vmem:[%s2 + $0x28] sm:$0xf]
  %v68 = vld [vmem:[%s2 + $0x2c] sm:$0xf]
  %v69 = vld [vmem:[%s2 + $0x30] sm:$0xf]
  %v70 = vld [vmem:[%s2 + $0x34] sm:$0xf]
  %v71 = vld [vmem:[%s2 + $0x38] sm:$0xf]
  %v72 = vld [vmem:[%s2 + $0x3c] sm:$0xf]
  %v73 = vld [vmem:[%s2 + $0x40] sm:$0xf]
  %v74 = vld [vmem:[%s2 + $0x44] sm:$0xf]
  %v75 = vld [vmem:[%s2 + $0x48] sm:$0xf]
  %v76 = vld [vmem:[%s2 + $0x4c] sm:$0xf]
  %v77 = vld [vmem:[%s2 + $0x50] sm:$0xf]
  %v78 = vld [vmem:[%s2 + $0x54] sm:$0xf]
  %v79 = vld [vmem:[%s2 + $0x58] sm:$0xf]
  %v80 = vld [vmem:[%s2 + $0x5c] sm:$0xf]
  %v81 = vld [vmem:[%s2 + $0x60] sm:$0xf]
  %v82 = vld [vmem:[%s2 + $0x64] sm:$0xf]
  %v83 = vld [vmem:[%s2 + $0x68] sm:$0xf]
  %v84 = vld [vmem:[%s2 + $0x6c] sm:$0xf]
  %v85 = vld [vmem:[%s2 + $0x70] sm:$0xf]
  %v86 = vld [vmem:[%s2 + $0x74] sm:$0xf]
  %v87 = vld [vmem:[%s2 + $0x78] sm:$0xf]
  %v88 = vld [vmem:[%s2 + $0x7c] sm:$0xf]
  %v89 = vld [vmem:[%s2 + $0x80] sm:$0xf]
  %v90 = vld [vmem:[%s2 + $0x84] sm:$0xf]
  %v91 = vld [vmem:[%s2 + $0x88] sm:$0xf]
  %v92 = vld [vmem:[%s2 + $0x8c] sm:$0xf]
  %v93 = vld [vmem:[%s2 + $0x90] sm:$0xf]
  %v94 = vld [vmem:[%s2 + $0x94] sm:$0xf]
  %v95 = vld [vmem:[%s2 + $0x98] sm:$0xf]
  %v96 = vld [vmem:[%s2 + $0x9c] sm:$0xf]
  %v97 = vld [vmem:[%s2 + $0xa0] sm:$0xf]
  %v98 = vld [vmem:[%s2 + $0xa4] sm:$0xf]
  %v99 = vld [vmem:[%s2 + $0xa8] sm:$0xf]
  %v100 = vld [vmem:[%s2 + $0xac] sm:$0xf]
  %v101 = vld [vmem:[%s2 + $0xb0] sm:$0xf]
  %v102 = vld [vmem:[%s2 + $0xb4] sm:$0xf]
  %v103 = vld [vmem:[%s2 + $0xb8] sm:$0xf]
  %v104 = vld [vmem:[%s2 + $0xbc] sm:$0xf]
  %v105 = vld [vmem:[%s2 + $0xc0] sm:$0xf]
  %v106 = vld [vmem:[%s2 + $0xc4] sm:$0xf]
  %v107 = vld [vmem:[%s2 + $0xc8] sm:$0xf]
  %v108 = vld [vmem:[%s2 + $0xcc] sm:$0xf]
  %v109 = vld [vmem:[%s2 + $0xd0] sm:$0xf]
  %v110 = vld [vmem:[%s2 + $0xd4] sm:$0xf]
  %v111 = vld [vmem:[%s2 + $0xd8] sm:$0xf]
  %v112 = vld [vmem:[%s2 + $0xdc] sm:$0xf]
  %v113 = vld [vmem:[%s2 + $0xe0] sm:$0xf]
  %v114 = vld [vmem:[%s2 + $0xe4] sm:$0xf]
  %v115 = vld [vmem:[%s2 + $0xe8] sm:$0xf]
  %v116 = vld [vmem:[%s2 + $0xec] sm:$0xf]
  %v117 = vld [vmem:[%s2 + $0xf0] sm:$0xf]
  %v118 = vld [vmem:[%s2 + $0xf4] sm:$0xf]
  %v119 = vld [vmem:[%s2 + $0xf8] sm:$0xf]
  %v120 = vld [vmem:[%s2 + $0xfc] sm:$0xf]
  %v121 = vld [vmem:[%s2 + $0x100] sm:$0xf]
  %v122 = vld [vmem:[%s2 + $0x104] sm:$0xf]
  %v123 = vld [vmem:[%s2 + $0x108] sm:$0xf]
  %v124 = vld [vmem:[%s2 + $0x10c] sm:$0xf]
  %v125 = vld [vmem:[%s2 + $0x110] sm:$0xf]
  %v126 = vld [vmem:[%s2 + $0x114] sm:$0xf]
  %v127 = vld [vmem:[%s2 + $0x118] sm:$0xf]
  %v128 = vld [vmem:[%s2 + $0x11c] sm:$0xf]
  %v129 = vld [vmem:[%s2 + $0x120] sm:$0xf]
  %v130 = vld [vmem:[%s2 + $0x124] sm:$0xf]
  %v131 = vld [vmem:[%s2 + $0x128] sm:$0xf]
  %v132 = vld [vmem:[%s2 + $0x12c] sm:$0xf]
  %v133 = vld [vmem:[%s2 + $0x130] sm:$0xf]
  %v134 = vld [vmem:[%s2 + $0x134] sm:$0xf]
  %v135 = vld [vmem:[%s2 + $0x138] sm:$0xf]
  %v136 = vld [vmem:[%s2 + $0x13c] sm:$0xf]
  %v137 = vld [vmem:[%s2 + $0x140] sm:$0xf]
  %v138 = vld [vmem:[%s2 + $0x144] sm:$0xf]
  %v139 = vld [vmem:[%s2 + $0x148] sm:$0xf]
  %v140 = vld [vmem:[%s2 + $0x14c] sm:$0xf]
  %v141 = vld [vmem:[%s2 + $0x150] sm:$0xf]
  %v142 = vld [vmem:[%s2 + $0x154] sm:$0xf]
  %v143 = vld [vmem:[%s2 + $0x158] sm:$0xf]
  %v144 = vld [vmem:[%s2 + $0x15c] sm:$0xf]
  %v145 = vld [vmem:[%s2 + $0x160] sm:$0xf]
  %v146 = vld [vmem:[%s2 + $0x164] sm:$0xf]
  %v147 = vld [vmem:[%s2 + $0x168] sm:$0xf]
  %v148 = vld [vmem:[%s2 + $0x16c] sm:$0xf]
  %v149 = vld [vmem:[%s2 + $0x170] sm:$0xf]
  %v150 = vld [vmem:[%s2 + $0x174] sm:$0xf]
  %v151 = vld [vmem:[%s2 + $0x178] sm:$0xf]
  %v152 = vld [vmem:[%s2 + $0x17c] sm:$0xf]
  %v153 = vld [vmem:[%s2 + $0x180] sm:$0xf]
  %v154 = vld [vmem:[%s2 + $0x184] sm:$0xf]
  %v155 = vld [vmem:[%s2 + $0x188] sm:$0xf]
  %v156 = vld [vmem:[%s2 + $0x18c] sm:$0xf]
  %v157 = vld [vmem:[%s2 + $0x190] sm:$0xf]
  %v158 = vld [vmem:[%s2 + $0x194] sm:$0xf]
  %v159 = vld [vmem:[%s2 + $0x198] sm:$0xf]
  %v160 = vld [vmem:[%s2 + $0x19c] sm:$0xf]
  %v161 = vld [vmem:[%s2 + $0x1a0] sm:$0xf]
  %v162 = vld [vmem:[%s2 + $0x1a4] sm:$0xf]
  %v163 = vld [vmem:[%s2 + $0x1a8] sm:$0xf]
  %v164 = vld [vmem:[%s2 + $0x1ac] sm:$0xf]
  %v165 = vld [vmem:[%s2 + $0x1b0] sm:$0xf]
  %v166 = vld [vmem:[%s2 + $0x1b4] sm:$0xf]
  %v167 = vld [vmem:[%s2 + $0x1b8] sm:$0xf]
  %v168 = vld [vmem:[%s2 + $0x1bc] sm:$0xf]
  %v169 = vld [vmem:[%s2 + $0x1c0] sm:$0xf]
  %v170 = vld [vmem:[%s2 + $0x1c4] sm:$0xf]
  %v171 = vld [vmem:[%s2 + $0x1c8] sm:$0xf]
  %v172 = vld [vmem:[%s2 + $0x1cc] sm:$0xf]
  %v173 = vld [vmem:[%s2 + $0x1d0] sm:$0xf]
  %v174 = vld [vmem:[%s2 + $0x1d4] sm:$0xf]
  %v175 = vld [vmem:[%s2 + $0x1d8] sm:$0xf]
  %v176 = vld [vmem:[%s2 + $0x1dc] sm:$0xf]
  %v177 = vld [vmem:[%s2 + $0x1e0] sm:$0xf]
  %v178 = vld [vmem:[%s2 + $0x1e4] sm:$0xf]
  %v179 = vld [vmem:[%s2 + $0x1e8] sm:$0xf]
  %v180 = vld [vmem:[%s2 + $0x1ec] sm:$0xf]
  %v181 = vld [vmem:[%s2 + $0x1f0] sm:$0xf]
  %v182 = vld [vmem:[%s2 + $0x1f4] sm:$0xf]
  %v183 = vld [vmem:[%s2 + $0x1f8] sm:$0xf]
  %v184 = vld [vmem:[%s2 + $0x1fc] sm:$0xf]
  %v185 = vld [vmem:[%s1] sm:$0xff]
  %v186 = vpack.c.bf16 %v185, %v185
  %v187 = vld [vmem:[%s3] sm:$0xf]
  %v188 = vld [vmem:[%s3 + $0x4] sm:$0xf]
  %v189 = vld [vmem:[%s3 + $0x8] sm:$0xf]
  %v190 = vld [vmem:[%s3 + $0xc] sm:$0xf]
  %v191 = vld [vmem:[%s3 + $0x10] sm:$0xf]
  %v192 = vld [vmem:[%s3 + $0x14] sm:$0xf]
  %v193 = vld [vmem:[%s3 + $0x18] sm:$0xf]
  %v194 = vld [vmem:[%s3 + $0x1c] sm:$0xf]
  %v195 = vld [vmem:[%s3 + $0x20] sm:$0xf]
  %v196 = vld [vmem:[%s3 + $0x24] sm:$0xf]
  %v197 = vld [vmem:[%s3 + $0x28] sm:$0xf]
  %v198 = vld [vmem:[%s3 + $0x2c] sm:$0xf]
  %v199 = vld [vmem:[%s3 + $0x30] sm:$0xf]
  %v200 = vld [vmem:[%s3 + $0x34] sm:$0xf]
  %v201 = vld [vmem:[%s3 + $0x38] sm:$0xf]
  %v202 = vld [vmem:[%s3 + $0x3c] sm:$0xf]
  %v219 = vunpack.c.l.b16 %v187
  %v220 = vunpack.c.l.b16 %v188
  %v221 = vunpack.c.l.b16 %v189
  %v222 = vunpack.c.l.b16 %v190
  %v223 = vunpack.c.l.b16 %v191
  %v224 = vunpack.c.l.b16 %v192
  %v225 = vunpack.c.l.b16 %v193
  %v226 = vunpack.c.l.b16 %v194
  %v227 = vunpack.c.l.b16 %v195
  %v228 = vunpack.c.l.b16 %v196
  %v229 = vunpack.c.l.b16 %v197
  %v230 = vunpack.c.l.b16 %v198
  %v231 = vunpack.c.l.b16 %v199
  %v232 = vunpack.c.l.b16 %v200
  %v233 = vunpack.c.l.b16 %v201
  %v234 = vunpack.c.l.b16 %v202
  %v235 = vpack.c.b16 %v220, %v219
  %v236 = vpack.c.b16 %v222, %v221
  %v237 = vpack.c.b16 %v224, %v223
  %v238 = vpack.c.b16 %v226, %v225
  %v239 = vpack.c.b16 %v228, %v227
  %v240 = vpack.c.b16 %v230, %v229
  %v241 = vpack.c.b16 %v232, %v231
  %v242 = vpack.c.b16 %v234, %v233
  %251 = vmatprep.subr.bf16.mxu0 0
  %252 = vmatpush1.bf16.msra.mxu0 %v235
  %253 = vmatprep.subr.bf16.mxu0 0
  %254 = vmatpush1.bf16.msra.mxu0 %v236
  %255 = vmatprep.subr.bf16.mxu0 0
  %256 = vmatpush1.bf16.msra.mxu0 %v237
  %257 = vmatprep.subr.bf16.mxu0 0
  %258 = vmatpush1.bf16.msra.mxu0 %v238
  %259 = vmatprep.subr.bf16.mxu0 0
  %260 = vmatpush1.bf16.msra.mxu0 %v239
  %261 = vmatprep.subr.bf16.mxu0 0
  %262 = vmatpush1.bf16.msra.mxu0 %v240
  %263 = vmatprep.subr.bf16.mxu0 0
  %264 = vmatpush1.bf16.msra.mxu0 %v241
  %265 = vmatprep.subr.bf16.mxu0 0
  %266 = vmatpush1.bf16.msra.mxu0 %v242
  %267 = vmatprep.subr.bf16.mxu0 0
  %268 = vmatpush1.bf16.msra.mxu0 0
  %269 = vmatprep.subr.bf16.mxu0 0
  %270 = vmatpush1.bf16.msra.mxu0 0
  %271 = vmatprep.subr.bf16.mxu0 0
  %272 = vmatpush1.bf16.msra.mxu0 0
  %273 = vmatprep.subr.bf16.mxu0 0
  %274 = vmatpush1.bf16.msra.mxu0 0
  %275 = vmatprep.subr.bf16.mxu0 0
  %276 = vmatpush1.bf16.msra.mxu0 0
  %277 = vmatprep.subr.bf16.mxu0 0
  %278 = vmatpush1.bf16.msra.mxu0 0
  %279 = vmatprep.subr.bf16.mxu0 0
  %280 = vmatpush1.bf16.msra.mxu0 0
  %281 = vmatprep.subr.bf16.mxu0 0
  %282 = vmatpush1.bf16.msra.mxu0 0
  %283 = vmatprep.mubr.bf16.mxu0 0
  %284 = vmatmul.mubr.bf16.gmra.mrb[0].mxu0 %v186
  %v285 = vpop.f32.mrb[0].mxu0
  %v286 = vadd.f32 0.0, %v285
  %v287 = vpop.f32.mrb[0].mxu0
  %v288 = vpop.f32.mrb[0].mxu0
  %v289 = vpop.f32.mrb[0].mxu0
  %290 = vdwg.mxu0
  %v419 = vunpack.c.l.b16 %v57
  %v420 = vunpack.c.l.b16 %v58
  %v421 = vunpack.c.l.b16 %v59
  %v422 = vunpack.c.l.b16 %v60
  %v423 = vunpack.c.l.b16 %v61
  %v424 = vunpack.c.l.b16 %v62
  %v425 = vunpack.c.l.b16 %v63
  %v426 = vunpack.c.l.b16 %v64
  %v427 = vunpack.c.l.b16 %v65
  %v428 = vunpack.c.l.b16 %v66
  %v429 = vunpack.c.l.b16 %v67
  %v430 = vunpack.c.l.b16 %v68
  %v431 = vunpack.c.l.b16 %v69
  %v432 = vunpack.c.l.b16 %v70
  %v433 = vunpack.c.l.b16 %v71
  %v434 = vunpack.c.l.b16 %v72
  %v435 = vunpack.c.l.b16 %v73
  %v436 = vunpack.c.l.b16 %v74
  %v437 = vunpack.c.l.b16 %v75
  %v438 = vunpack.c.l.b16 %v76
  %v439 = vunpack.c.l.b16 %v77
  %v440 = vunpack.c.l.b16 %v78
  %v441 = vunpack.c.l.b16 %v79
  %v442 = vunpack.c.l.b16 %v80
  %v443 = vunpack.c.l.b16 %v81
  %v444 = vunpack.c.l.b16 %v82
  %v445 = vunpack.c.l.b16 %v83
  %v446 = vunpack.c.l.b16 %v84
  %v447 = vunpack.c.l.b16 %v85
  %v448 = vunpack.c.l.b16 %v86
  %v449 = vunpack.c.l.b16 %v87
  %v450 = vunpack.c.l.b16 %v88
  %v451 = vunpack.c.l.b16 %v89
  %v452 = vunpack.c.l.b16 %v90
  %v453 = vunpack.c.l.b16 %v91
  %v454 = vunpack.c.l.b16 %v92
  %v455 = vunpack.c.l.b16 %v93
  %v456 = vunpack.c.l.b16 %v94
  %v457 = vunpack.c.l.b16 %v95
  %v458 = vunpack.c.l.b16 %v96
  %v459 = vunpack.c.l.b16 %v97
  %v460 = vunpack.c.l.b16 %v98
  %v461 = vunpack.c.l.b16 %v99
  %v462 = vunpack.c.l.b16 %v100
  %v463 = vunpack.c.l.b16 %v101
  %v464 = vunpack.c.l.b16 %v102
  %v465 = vunpack.c.l.b16 %v103
  %v466 = vunpack.c.l.b16 %v104
  %v467 = vunpack.c.l.b16 %v105
  %v468 = vunpack.c.l.b16 %v106
  %v469 = vunpack.c.l.b16 %v107
  %v470 = vunpack.c.l.b16 %v108
  %v471 = vunpack.c.l.b16 %v109
  %v472 = vunpack.c.l.b16 %v110
  %v473 = vunpack.c.l.b16 %v111
  %v474 = vunpack.c.l.b16 %v112
  %v475 = vunpack.c.l.b16 %v113
  %v476 = vunpack.c.l.b16 %v114
  %v477 = vunpack.c.l.b16 %v115
  %v478 = vunpack.c.l.b16 %v116
  %v479 = vunpack.c.l.b16 %v117
  %v480 = vunpack.c.l.b16 %v118
  %v481 = vunpack.c.l.b16 %v119
  %v482 = vunpack.c.l.b16 %v120
  %v483 = vunpack.c.l.b16 %v121
  %v484 = vunpack.c.l.b16 %v122
  %v485 = vunpack.c.l.b16 %v123
  %v486 = vunpack.c.l.b16 %v124
  %v487 = vunpack.c.l.b16 %v125
  %v488 = vunpack.c.l.b16 %v126
  %v489 = vunpack.c.l.b16 %v127
  %v490 = vunpack.c.l.b16 %v128
  %v491 = vunpack.c.l.b16 %v129
  %v492 = vunpack.c.l.b16 %v130
  %v493 = vunpack.c.l.b16 %v131
  %v494 = vunpack.c.l.b16 %v132
  %v495 = vunpack.c.l.b16 %v133
  %v496 = vunpack.c.l.b16 %v134
  %v497 = vunpack.c.l.b16 %v135
  %v498 = vunpack.c.l.b16 %v136
  %v499 = vunpack.c.l.b16 %v137
  %v500 = vunpack.c.l.b16 %v138
  %v501 = vunpack.c.l.b16 %v139
  %v502 = vunpack.c.l.b16 %v140
  %v503 = vunpack.c.l.b16 %v141
  %v504 = vunpack.c.l.b16 %v142
  %v505 = vunpack.c.l.b16 %v143
  %v506 = vunpack.c.l.b16 %v144
  %v507 = vunpack.c.l.b16 %v145
  %v508 = vunpack.c.l.b16 %v146
  %v509 = vunpack.c.l.b16 %v147
  %v510 = vunpack.c.l.b16 %v148
  %v511 = vunpack.c.l.b16 %v149
  %v512 = vunpack.c.l.b16 %v150
  %v513 = vunpack.c.l.b16 %v151
  %v514 = vunpack.c.l.b16 %v152
  %v515 = vunpack.c.l.b16 %v153
  %v516 = vunpack.c.l.b16 %v154
  %v517 = vunpack.c.l.b16 %v155
  %v518 = vunpack.c.l.b16 %v156
  %v519 = vunpack.c.l.b16 %v157
  %v520 = vunpack.c.l.b16 %v158
  %v521 = vunpack.c.l.b16 %v159
  %v522 = vunpack.c.l.b16 %v160
  %v523 = vunpack.c.l.b16 %v161
  %v524 = vunpack.c.l.b16 %v162
  %v525 = vunpack.c.l.b16 %v163
  %v526 = vunpack.c.l.b16 %v164
  %v527 = vunpack.c.l.b16 %v165
  %v528 = vunpack.c.l.b16 %v166
  %v529 = vunpack.c.l.b16 %v167
  %v530 = vunpack.c.l.b16 %v168
  %v531 = vunpack.c.l.b16 %v169
  %v532 = vunpack.c.l.b16 %v170
  %v533 = vunpack.c.l.b16 %v171
  %v534 = vunpack.c.l.b16 %v172
  %v535 = vunpack.c.l.b16 %v173
  %v536 = vunpack.c.l.b16 %v174
  %v537 = vunpack.c.l.b16 %v175
  %v538 = vunpack.c.l.b16 %v176
  %v539 = vunpack.c.l.b16 %v177
  %v540 = vunpack.c.l.b16 %v178
  %v541 = vunpack.c.l.b16 %v179
  %v542 = vunpack.c.l.b16 %v180
  %v543 = vunpack.c.l.b16 %v181
  %v544 = vunpack.c.l.b16 %v182
  %v545 = vunpack.c.l.b16 %v183
  %v546 = vunpack.c.l.b16 %v184
  %v547 = vpack.c.b16 %v420, %v419
  %v548 = vpack.c.b16 %v422, %v421
  %v549 = vpack.c.b16 %v424, %v423
  %v550 = vpack.c.b16 %v426, %v425
  %v551 = vpack.c.b16 %v428, %v427
  %v552 = vpack.c.b16 %v430, %v429
  %v553 = vpack.c.b16 %v432, %v431
  %v554 = vpack.c.b16 %v434, %v433
  %v555 = vpack.c.b16 %v436, %v435
  %v556 = vpack.c.b16 %v438, %v437
  %v557 = vpack.c.b16 %v440, %v439
  %v558 = vpack.c.b16 %v442, %v441
  %v559 = vpack.c.b16 %v444, %v443
  %v560 = vpack.c.b16 %v446, %v445
  %v561 = vpack.c.b16 %v448, %v447
  %v562 = vpack.c.b16 %v450, %v449
  %v563 = vpack.c.b16 %v452, %v451
  %v564 = vpack.c.b16 %v454, %v453
  %v565 = vpack.c.b16 %v456, %v455
  %v566 = vpack.c.b16 %v458, %v457
  %v567 = vpack.c.b16 %v460, %v459
  %v568 = vpack.c.b16 %v462, %v461
  %v569 = vpack.c.b16 %v464, %v463
  %v570 = vpack.c.b16 %v466, %v465
  %v571 = vpack.c.b16 %v468, %v467
  %v572 = vpack.c.b16 %v470, %v469
  %v573 = vpack.c.b16 %v472, %v471
  %v574 = vpack.c.b16 %v474, %v473
  %v575 = vpack.c.b16 %v476, %v475
  %v576 = vpack.c.b16 %v478, %v477
  %v577 = vpack.c.b16 %v480, %v479
  %v578 = vpack.c.b16 %v482, %v481
  %v579 = vpack.c.b16 %v484, %v483
  %v580 = vpack.c.b16 %v486, %v485
  %v581 = vpack.c.b16 %v488, %v487
  %v582 = vpack.c.b16 %v490, %v489
  %v583 = vpack.c.b16 %v492, %v491
  %v584 = vpack.c.b16 %v494, %v493
  %v585 = vpack.c.b16 %v496, %v495
  %v586 = vpack.c.b16 %v498, %v497
  %v587 = vpack.c.b16 %v500, %v499
  %v588 = vpack.c.b16 %v502, %v501
  %v589 = vpack.c.b16 %v504, %v503
  %v590 = vpack.c.b16 %v506, %v505
  %v591 = vpack.c.b16 %v508, %v507
  %v592 = vpack.c.b16 %v510, %v509
  %v593 = vpack.c.b16 %v512, %v511
  %v594 = vpack.c.b16 %v514, %v513
  %v595 = vpack.c.b16 %v516, %v515
  %v596 = vpack.c.b16 %v518, %v517
  %v597 = vpack.c.b16 %v520, %v519
  %v598 = vpack.c.b16 %v522, %v521
  %v599 = vpack.c.b16 %v524, %v523
  %v600 = vpack.c.b16 %v526, %v525
  %v601 = vpack.c.b16 %v528, %v527
  %v602 = vpack.c.b16 %v530, %v529
  %v603 = vpack.c.b16 %v532, %v531
  %v604 = vpack.c.b16 %v534, %v533
  %v605 = vpack.c.b16 %v536, %v535
  %v606 = vpack.c.b16 %v538, %v537
  %v607 = vpack.c.b16 %v540, %v539
  %v608 = vpack.c.b16 %v542, %v541
  %v609 = vpack.c.b16 %v544, %v543
  %v610 = vpack.c.b16 %v546, %v545
  %675 = vmatprep.subr.bf16.mxu0 0
  %676 = vmatpush1.bf16.msra.mxu0 %v547
  %677 = vmatprep.subr.bf16.mxu0 0
  %678 = vmatpush1.bf16.msra.mxu0 %v548
  %679 = vmatprep.subr.bf16.mxu0 0
  %680 = vmatpush1.bf16.msra.mxu0 %v549
  %681 = vmatprep.subr.bf16.mxu0 0
  %682 = vmatpush1.bf16.msra.mxu0 %v550
  %683 = vmatprep.subr.bf16.mxu0 0
  %684 = vmatpush1.bf16.msra.mxu0 %v551
  %685 = vmatprep.subr.bf16.mxu0 0
  %686 = vmatpush1.bf16.msra.mxu0 %v552
  %687 = vmatprep.subr.bf16.mxu0 0
  %688 = vmatpush1.bf16.msra.mxu0 %v553
  %689 = vmatprep.subr.bf16.mxu0 0
  %690 = vmatpush1.bf16.msra.mxu0 %v554
  %691 = vmatprep.subr.bf16.mxu0 0
  %692 = vmatpush1.bf16.msra.mxu0 %v555
  %693 = vmatprep.subr.bf16.mxu0 0
  %694 = vmatpush1.bf16.msra.mxu0 %v556
  %695 = vmatprep.subr.bf16.mxu0 0
  %696 = vmatpush1.bf16.msra.mxu0 %v557
  %697 = vmatprep.subr.bf16.mxu0 0
  %698 = vmatpush1.bf16.msra.mxu0 %v558
  %699 = vmatprep.subr.bf16.mxu0 0
  %700 = vmatpush1.bf16.msra.mxu0 %v559
  %701 = vmatprep.subr.bf16.mxu0 0
  %702 = vmatpush1.bf16.msra.mxu0 %v560
  %703 = vmatprep.subr.bf16.mxu0 0
  %704 = vmatpush1.bf16.msra.mxu0 %v561
  %705 = vmatprep.subr.bf16.mxu0 0
  %706 = vmatpush1.bf16.msra.mxu0 %v562
  %707 = vmatprep.mubr.bf16.mxu0 %v50
  %708 = vmatmul.mubr.bf16.gmra.mrb[0].mxu0 %v49
  %v709 = vpop.f32.mrb[0].mxu0
  %v710 = vadd.f32 %v286, %v709
  %v711 = vpop.f32.mrb[0].mxu0
  %v712 = vpop.f32.mrb[0].mxu0
  %v713 = vpop.f32.mrb[0].mxu0
  %714 = vdwg.mxu0
  %715 = vmatprep.subr.bf16.mxu0 0
  %716 = vmatpush1.bf16.msra.mxu0 %v563
  %717 = vmatprep.subr.bf16.mxu0 0
  %718 = vmatpush1.bf16.msra.mxu0 %v564
  %719 = vmatprep.subr.bf16.mxu0 0
  %720 = vmatpush1.bf16.msra.mxu0 %v565
  %721 = vmatprep.subr.bf16.mxu0 0
  %722 = vmatpush1.bf16.msra.mxu0 %v566
  %723 = vmatprep.subr.bf16.mxu0 0
  %724 = vmatpush1.bf16.msra.mxu0 %v567
  %725 = vmatprep.subr.bf16.mxu0 0
  %726 = vmatpush1.bf16.msra.mxu0 %v568
  %727 = vmatprep.subr.bf16.mxu0 0
  %728 = vmatpush1.bf16.msra.mxu0 %v569
  %729 = vmatprep.subr.bf16.mxu0 0
  %730 = vmatpush1.bf16.msra.mxu0 %v570
  %731 = vmatprep.subr.bf16.mxu0 0
  %732 = vmatpush1.bf16.msra.mxu0 %v571
  %733 = vmatprep.subr.bf16.mxu0 0
  %734 = vmatpush1.bf16.msra.mxu0 %v572
  %735 = vmatprep.subr.bf16.mxu0 0
  %736 = vmatpush1.bf16.msra.mxu0 %v573
  %737 = vmatprep.subr.bf16.mxu0 0
  %738 = vmatpush1.bf16.msra.mxu0 %v574
  %739 = vmatprep.subr.bf16.mxu0 0
  %740 = vmatpush1.bf16.msra.mxu0 %v575
  %741 = vmatprep.subr.bf16.mxu0 0
  %742 = vmatpush1.bf16.msra.mxu0 %v576
  %743 = vmatprep.subr.bf16.mxu0 0
  %744 = vmatpush1.bf16.msra.mxu0 %v577
  %745 = vmatprep.subr.bf16.mxu0 0
  %746 = vmatpush1.bf16.msra.mxu0 %v578
  %747 = vmatprep.mubr.bf16.mxu0 %v52
  %748 = vmatmul.mubr.bf16.gmra.mrb[0].mxu0 %v51
  %v749 = vpop.f32.mrb[0].mxu0
  %v750 = vadd.f32 %v710, %v749
  %v751 = vpop.f32.mrb[0].mxu0
  %v752 = vpop.f32.mrb[0].mxu0
  %v753 = vpop.f32.mrb[0].mxu0
  %754 = vdwg.mxu0
  %755 = vmatprep.subr.bf16.mxu0 0
  %756 = vmatpush1.bf16.msra.mxu0 %v579
  %757 = vmatprep.subr.bf16.mxu0 0
  %758 = vmatpush1.bf16.msra.mxu0 %v580
  %759 = vmatprep.subr.bf16.mxu0 0
  %760 = vmatpush1.bf16.msra.mxu0 %v581
  %761 = vmatprep.subr.bf16.mxu0 0
  %762 = vmatpush1.bf16.msra.mxu0 %v582
  %763 = vmatprep.subr.bf16.mxu0 0
  %764 = vmatpush1.bf16.msra.mxu0 %v583
  %765 = vmatprep.subr.bf16.mxu0 0
  %766 = vmatpush1.bf16.msra.mxu0 %v584
  %767 = vmatprep.subr.bf16.mxu0 0
  %768 = vmatpush1.bf16.msra.mxu0 %v585
  %769 = vmatprep.subr.bf16.mxu0 0
  %770 = vmatpush1.bf16.msra.mxu0 %v586
  %771 = vmatprep.subr.bf16.mxu0 0
  %772 = vmatpush1.bf16.msra.mxu0 %v587
  %773 = vmatprep.subr.bf16.mxu0 0
  %774 = vmatpush1.bf16.msra.mxu0 %v588
  %775 = vmatprep.subr.bf16.mxu0 0
  %776 = vmatpush1.bf16.msra.mxu0 %v589
  %777 = vmatprep.subr.bf16.mxu0 0
  %778 = vmatpush1.bf16.msra.mxu0 %v590
  %779 = vmatprep.subr.bf16.mxu0 0
  %780 = vmatpush1.bf16.msra.mxu0 %v591
  %781 = vmatprep.subr.bf16.mxu0 0
  %782 = vmatpush1.bf16.msra.mxu0 %v592
  %783 = vmatprep.subr.bf16.mxu0 0
  %784 = vmatpush1.bf16.msra.mxu0 %v593
  %785 = vmatprep.subr.bf16.mxu0 0
  %786 = vmatpush1.bf16.msra.mxu0 %v594
  %787 = vmatprep.mubr.bf16.mxu0 %v54
  %788 = vmatmul.mubr.bf16.gmra.mrb[0].mxu0 %v53
  %v789 = vpop.f32.mrb[0].mxu0
  %v790 = vadd.f32 %v750, %v789
  %v791 = vpop.f32.mrb[0].mxu0
  %v792 = vpop.f32.mrb[0].mxu0
  %v793 = vpop.f32.mrb[0].mxu0
  %794 = vdwg.mxu0
  %795 = vmatprep.subr.bf16.mxu0 0
  %796 = vmatpush1.bf16.msra.mxu0 %v595
  %797 = vmatprep.subr.bf16.mxu0 0
  %798 = vmatpush1.bf16.msra.mxu0 %v596
  %799 = vmatprep.subr.bf16.mxu0 0
  %800 = vmatpush1.bf16.msra.mxu0 %v597
  %801 = vmatprep.subr.bf16.mxu0 0
  %802 = vmatpush1.bf16.msra.mxu0 %v598
  %803 = vmatprep.subr.bf16.mxu0 0
  %804 = vmatpush1.bf16.msra.mxu0 %v599
  %805 = vmatprep.subr.bf16.mxu0 0
  %806 = vmatpush1.bf16.msra.mxu0 %v600
  %807 = vmatprep.subr.bf16.mxu0 0
  %808 = vmatpush1.bf16.msra.mxu0 %v601
  %809 = vmatprep.subr.bf16.mxu0 0
  %810 = vmatpush1.bf16.msra.mxu0 %v602
  %811 = vmatprep.subr.bf16.mxu0 0
  %812 = vmatpush1.bf16.msra.mxu0 %v603
  %813 = vmatprep.subr.bf16.mxu0 0
  %814 = vmatpush1.bf16.msra.mxu0 %v604
  %815 = vmatprep.subr.bf16.mxu0 0
  %816 = vmatpush1.bf16.msra.mxu0 %v605
  %817 = vmatprep.subr.bf16.mxu0 0
  %818 = vmatpush1.bf16.msra.mxu0 %v606
  %819 = vmatprep.subr.bf16.mxu0 0
  %820 = vmatpush1.bf16.msra.mxu0 %v607
  %821 = vmatprep.subr.bf16.mxu0 0
  %822 = vmatpush1.bf16.msra.mxu0 %v608
  %823 = vmatprep.subr.bf16.mxu0 0
  %824 = vmatpush1.bf16.msra.mxu0 %v609
  %825 = vmatprep.subr.bf16.mxu0 0
  %826 = vmatpush1.bf16.msra.mxu0 %v610
  %827 = vmatprep.mubr.bf16.mxu0 %v56
  %828 = vmatmul.mubr.bf16.gmra.mrb[0].mxu0 %v55
  %v829 = vpop.f32.mrb[0].mxu0
  %v830 = vadd.f32 %v790, %v829
  %v831 = vpop.f32.mrb[0].mxu0
  %v832 = vpop.f32.mrb[0].mxu0
  %v833 = vpop.f32.mrb[0].mxu0
  %834 = vdwg.mxu0
  %v835 = vld [vmem:[%s4] sm:$0x1]
  %v837 = vlaneseq
  %v838 = vshrl.u32 %v837, 7
  %v839 = vsub.s32 0, %v838
  %v840 = vrot.slane %v835, %v839
  %v842 = vadd.f32 %v830, %v840
  %v843 = vmax.f32 %v842, 0.0
  %v844 = vpack.c.bf16 %v843, %v843
  %v845 = vld [vmem:[%s5] sm:$0xff]
  %v846 = vld [vmem:[%s5 + $0x8] sm:$0xf]
  %v847 = vld [vmem:[%s5 + $0xc] sm:$0xff]
  %v848 = vld [vmem:[%s5 + $0x14] sm:$0xf]
  %v849 = vld [vmem:[%s5 + $0x18] sm:$0xff]
  %v850 = vld [vmem:[%s5 + $0x20] sm:$0xf]
  %v851 = vld [vmem:[%s5 + $0x24] sm:$0xff]
  %v852 = vld [vmem:[%s5 + $0x2c] sm:$0xf]
  %v853 = vld [vmem:[%s5 + $0x30] sm:$0xff]
  %v854 = vld [vmem:[%s5 + $0x38] sm:$0xf]
  %v855 = vld [vmem:[%s5 + $0x3c] sm:$0xff]
  %v856 = vld [vmem:[%s5 + $0x44] sm:$0xf]
  %v857 = vld [vmem:[%s5 + $0x48] sm:$0xff]
  %v858 = vld [vmem:[%s5 + $0x50] sm:$0xf]
  %v859 = vld [vmem:[%s5 + $0x54] sm:$0xff]
  %v860 = vld [vmem:[%s5 + $0x5c] sm:$0xf]
  %v861 = vld [vmem:[%s5 + $0x60] sm:$0xff]
  %v862 = vld [vmem:[%s5 + $0x68] sm:$0xf]
  %v863 = vld [vmem:[%s5 + $0x6c] sm:$0xff]
  %v864 = vld [vmem:[%s5 + $0x74] sm:$0xf]
  %v865 = vld [vmem:[%s5 + $0x78] sm:$0xff]
  %v866 = vld [vmem:[%s5 + $0x80] sm:$0xf]
  %v867 = vld [vmem:[%s5 + $0x84] sm:$0xff]
  %v868 = vld [vmem:[%s5 + $0x8c] sm:$0xf]
  %v869 = vld [vmem:[%s5 + $0x90] sm:$0xff]
  %v870 = vld [vmem:[%s5 + $0x98] sm:$0xf]
  %v871 = vld [vmem:[%s5 + $0x9c] sm:$0xff]
  %v872 = vld [vmem:[%s5 + $0xa4] sm:$0xf]
  %v873 = vld [vmem:[%s5 + $0xa8] sm:$0xff]
  %v874 = vld [vmem:[%s5 + $0xb0] sm:$0xf]
  %v875 = vld [vmem:[%s5 + $0xb4] sm:$0xff]
  %v876 = vld [vmem:[%s5 + $0xbc] sm:$0xf]
  %v909 = vunpack.c.l.b16 %v845
  %v910 = vunpack.c.h.b16 %v845
  %v911 = vunpack.c.l.b16 %v846
  %v912 = vunpack.c.l.b16 %v847
  %v913 = vunpack.c.h.b16 %v847
  %v914 = vunpack.c.l.b16 %v848
  %v915 = vunpack.c.l.b16 %v849
  %v916 = vunpack.c.h.b16 %v849
  %v917 = vunpack.c.l.b16 %v850
  %v918 = vunpack.c.l.b16 %v851
  %v919 = vunpack.c.h.b16 %v851
  %v920 = vunpack.c.l.b16 %v852
  %v921 = vunpack.c.l.b16 %v853
  %v922 = vunpack.c.h.b16 %v853
  %v923 = vunpack.c.l.b16 %v854
  %v924 = vunpack.c.l.b16 %v855
  %v925 = vunpack.c.h.b16 %v855
  %v926 = vunpack.c.l.b16 %v856
  %v927 = vunpack.c.l.b16 %v857
  %v928 = vunpack.c.h.b16 %v857
  %v929 = vunpack.c.l.b16 %v858
  %v930 = vunpack.c.l.b16 %v859
  %v931 = vunpack.c.h.b16 %v859
  %v932 = vunpack.c.l.b16 %v860
  %v933 = vunpack.c.l.b16 %v861
  %v934 = vunpack.c.h.b16 %v861
  %v935 = vunpack.c.l.b16 %v862
  %v936 = vunpack.c.l.b16 %v863
  %v937 = vunpack.c.h.b16 %v863
  %v938 = vunpack.c.l.b16 %v864
  %v939 = vunpack.c.l.b16 %v865
  %v940 = vunpack.c.h.b16 %v865
  %v941 = vunpack.c.l.b16 %v866
  %v942 = vunpack.c.l.b16 %v867
  %v943 = vunpack.c.h.b16 %v867
  %v944 = vunpack.c.l.b16 %v868
  %v945 = vunpack.c.l.b16 %v869
  %v946 = vunpack.c.h.b16 %v869
  %v947 = vunpack.c.l.b16 %v870
  %v948 = vunpack.c.l.b16 %v871
  %v949 = vunpack.c.h.b16 %v871
  %v950 = vunpack.c.l.b16 %v872
  %v951 = vunpack.c.l.b16 %v873
  %v952 = vunpack.c.h.b16 %v873
  %v953 = vunpack.c.l.b16 %v874
  %v954 = vunpack.c.l.b16 %v875
  %v955 = vunpack.c.h.b16 %v875
  %v956 = vunpack.c.l.b16 %v876
  %v957 = vpack.c.b16 %v912, %v909
  %v958 = vpack.c.b16 %v913, %v910
  %v959 = vpack.c.b16 %v914, %v911
  %v960 = vpack.c.b16 %v918, %v915
  %v961 = vpack.c.b16 %v919, %v916
  %v962 = vpack.c.b16 %v920, %v917
  %v963 = vpack.c.b16 %v924, %v921
  %v964 = vpack.c.b16 %v925, %v922
  %v965 = vpack.c.b16 %v926, %v923
  %v966 = vpack.c.b16 %v930, %v927
  %v967 = vpack.c.b16 %v931, %v928
  %v968 = vpack.c.b16 %v932, %v929
  %v969 = vpack.c.b16 %v936, %v933
  %v970 = vpack.c.b16 %v937, %v934
  %v971 = vpack.c.b16 %v938, %v935
  %v972 = vpack.c.b16 %v942, %v939
  %v973 = vpack.c.b16 %v943, %v940
  %v974 = vpack.c.b16 %v944, %v941
  %v975 = vpack.c.b16 %v948, %v945
  %v976 = vpack.c.b16 %v949, %v946
  %v977 = vpack.c.b16 %v950, %v947
  %v978 = vpack.c.b16 %v954, %v951
  %v979 = vpack.c.b16 %v955, %v952
  %v980 = vpack.c.b16 %v956, %v953
  %1005 = vmatprep.subr.bf16.mxu0 %v958
  %1006 = vmatpush1.bf16.msra.mxu0 %v957
  %1007 = vmatprep.subr.bf16.mxu0 %v961
  %1008 = vmatpush1.bf16.msra.mxu0 %v960
  %1009 = vmatprep.subr.bf16.mxu0 %v964
  %1010 = vmatpush1.bf16.msra.mxu0 %v963
  %1011 = vmatprep.subr.bf16.mxu0 %v967
  %1012 = vmatpush1.bf16.msra.mxu0 %v966
  %1013 = vmatprep.subr.bf16.mxu0 %v970
  %1014 = vmatpush1.bf16.msra.mxu0 %v969
  %1015 = vmatprep.subr.bf16.mxu0 %v973
  %1016 = vmatpush1.bf16.msra.mxu0 %v972
  %1017 = vmatprep.subr.bf16.mxu0 %v976
  %1018 = vmatpush1.bf16.msra.mxu0 %v975
  %1019 = vmatprep.subr.bf16.mxu0 %v979
  %1020 = vmatpush1.bf16.msra.mxu0 %v978
  %1021 = vmatprep.subr.bf16.mxu0 0
  %1022 = vmatpush1.bf16.msra.mxu0 0
  %1023 = vmatprep.subr.bf16.mxu0 0
  %1024 = vmatpush1.bf16.msra.mxu0 0
  %1025 = vmatprep.subr.bf16.mxu0 0
  %1026 = vmatpush1.bf16.msra.mxu0 0
  %1027 = vmatprep.subr.bf16.mxu0 0
  %1028 = vmatpush1.bf16.msra.mxu0 0
  %1029 = vmatprep.subr.bf16.mxu0 0
  %1030 = vmatpush1.bf16.msra.mxu0 0
  %1031 = vmatprep.subr.bf16.mxu0 0
  %1032 = vmatpush1.bf16.msra.mxu0 0
  %1033 = vmatprep.subr.bf16.mxu0 0
  %1034 = vmatpush1.bf16.msra.mxu0 0
  %1035 = vmatprep.subr.bf16.mxu0 0
  %1036 = vmatpush1.bf16.msra.mxu0 0
  %1037 = vmatprep.mubr.bf16.mxu0 0
  %1038 = vmatmul.mubr.bf16.gmra.mrb[0].mxu0 %v844
  %v1039 = vpop.f32.mrb[0].mxu0
  %v1040 = vadd.f32 0.0, %v1039
  %v1041 = vpop.f32.mrb[0].mxu0
  %v1042 = vadd.f32 0.0, %v1041
  %v1043 = vpop.f32.mrb[0].mxu0
  %v1044 = vpop.f32.mrb[0].mxu0
  %1045 = vdwg.mxu0
  %1046 = vmatprep.subr.bf16.mxu0 0
  %1047 = vmatpush1.bf16.msra.mxu0 %v959
  %1048 = vmatprep.subr.bf16.mxu0 0
  %1049 = vmatpush1.bf16.msra.mxu0 %v962
  %1050 = vmatprep.subr.bf16.mxu0 0
  %1051 = vmatpush1.bf16.msra.mxu0 %v965
  %1052 = vmatprep.subr.bf16.mxu0 0
  %1053 = vmatpush1.bf16.msra.mxu0 %v968
  %1054 = vmatprep.subr.bf16.mxu0 0
  %1055 = vmatpush1.bf16.msra.mxu0 %v971
  %1056 = vmatprep.subr.bf16.mxu0 0
  %1057 = vmatpush1.bf16.msra.mxu0 %v974
  %1058 = vmatprep.subr.bf16.mxu0 0
  %1059 = vmatpush1.bf16.msra.mxu0 %v977
  %1060 = vmatprep.subr.bf16.mxu0 0
  %1061 = vmatpush1.bf16.msra.mxu0 %v980
  %1062 = vmatprep.subr.bf16.mxu0 0
  %1063 = vmatpush1.bf16.msra.mxu0 0
  %1064 = vmatprep.subr.bf16.mxu0 0
  %1065 = vmatpush1.bf16.msra.mxu0 0
  %1066 = vmatprep.subr.bf16.mxu0 0
  %1067 = vmatpush1.bf16.msra.mxu0 0
  %1068 = vmatprep.subr.bf16.mxu0 0
  %1069 = vmatpush1.bf16.msra.mxu0 0
  %1070 = vmatprep.subr.bf16.mxu0 0
  %1071 = vmatpush1.bf16.msra.mxu0 0
  %1072 = vmatprep.subr.bf16.mxu0 0
  %1073 = vmatpush1.bf16.msra.mxu0 0
  %1074 = vmatprep.subr.bf16.mxu0 0
  %1075 = vmatpush1.bf16.msra.mxu0 0
  %1076 = vmatprep.subr.bf16.mxu0 0
  %1077 = vmatpush1.bf16.msra.mxu0 0
  %1078 = vmatprep.mubr.bf16.mxu0 0
  %1079 = vmatmul.mubr.bf16.gmra.mrb[0].mxu0 %v844
  %v1080 = vpop.f32.mrb[0].mxu0
  %v1081 = vadd.f32 0.0, %v1080
  %v1082 = vpop.f32.mrb[0].mxu0
  %v1083 = vpop.f32.mrb[0].mxu0
  %v1084 = vpop.f32.mrb[0].mxu0
  %1085 = vdwg.mxu0
  %v1086 = vld [vmem:[%s6] sm:$0x3]
  %v1088 = vlaneseq
  %v1089 = vshrl.u32 %v1088, 7
  %v1090 = vsub.s32 0, %v1089
  %v1091 = vrot.slane %v1086, %v1090
  %v1092 = vlaneseq
  %v1093 = vshrl.u32 %v1092, 7
  %v1094 = vsub.s32 1, %v1093
  %v1095 = vrot.slane %v1086, %v1094
  %v1098 = vadd.f32 %v1042, %v1091
  %v1099 = vadd.f32 %v1081, %v1095
  %1100 = vst [vmem:[%s12] sm:$0xff] %v1098
  %1101 = vst [vmem:[%s12 + $0x8] sm:$0xff] %v1099
  %v1102 = vmul.f32 %v1099, 0.5
  %v1103 = vmul.f32 %v1102, 1.442695
  %v1104 = vpow.pop %v1103
  %v1105 = vld [vmem:[%s1] sm:$0xff]
  %v1106 = vmul.f32 %v1104, %v1105
  %v1107 = vadd.f32 %v1098, %v1106
  %v1108 = vpack.c.bf16 %v1107, %v1107
  %v1109 = vld [vmem:[%s7] sm:$0xf]
  %v1110 = vld [vmem:[%s7 + $0x4] sm:$0xf]
  %v1111 = vld [vmem:[%s7 + $0x8] sm:$0xf]
  %v1112 = vld [vmem:[%s7 + $0xc] sm:$0xf]
  %v1113 = vld [vmem:[%s7 + $0x10] sm:$0xf]
  %v1114 = vld [vmem:[%s7 + $0x14] sm:$0xf]
  %v1115 = vld [vmem:[%s7 + $0x18] sm:$0xf]
  %v1116 = vld [vmem:[%s7 + $0x1c] sm:$0xf]
  %v1117 = vld [vmem:[%s7 + $0x20] sm:$0xf]
  %v1118 = vld [vmem:[%s7 + $0x24] sm:$0xf]
  %v1119 = vld [vmem:[%s7 + $0x28] sm:$0xf]
  %v1120 = vld [vmem:[%s7 + $0x2c] sm:$0xf]
  %v1121 = vld [vmem:[%s7 + $0x30] sm:$0xf]
  %v1122 = vld [vmem:[%s7 + $0x34] sm:$0xf]
  %v1123 = vld [vmem:[%s7 + $0x38] sm:$0xf]
  %v1124 = vld [vmem:[%s7 + $0x3c] sm:$0xf]
  %v1141 = vunpack.c.l.b16 %v1109
  %v1142 = vunpack.c.l.b16 %v1110
  %v1143 = vunpack.c.l.b16 %v1111
  %v1144 = vunpack.c.l.b16 %v1112
  %v1145 = vunpack.c.l.b16 %v1113
  %v1146 = vunpack.c.l.b16 %v1114
  %v1147 = vunpack.c.l.b16 %v1115
  %v1148 = vunpack.c.l.b16 %v1116
  %v1149 = vunpack.c.l.b16 %v1117
  %v1150 = vunpack.c.l.b16 %v1118
  %v1151 = vunpack.c.l.b16 %v1119
  %v1152 = vunpack.c.l.b16 %v1120
  %v1153 = vunpack.c.l.b16 %v1121
  %v1154 = vunpack.c.l.b16 %v1122
  %v1155 = vunpack.c.l.b16 %v1123
  %v1156 = vunpack.c.l.b16 %v1124
  %v1157 = vpack.c.b16 %v1142, %v1141
  %v1158 = vpack.c.b16 %v1144, %v1143
  %v1159 = vpack.c.b16 %v1146, %v1145
  %v1160 = vpack.c.b16 %v1148, %v1147
  %v1161 = vpack.c.b16 %v1150, %v1149
  %v1162 = vpack.c.b16 %v1152, %v1151
  %v1163 = vpack.c.b16 %v1154, %v1153
  %v1164 = vpack.c.b16 %v1156, %v1155
  %1173 = vmatprep.subr.bf16.mxu0 0
  %1174 = vmatpush1.bf16.msra.mxu0 %v1157
  %1175 = vmatprep.subr.bf16.mxu0 0
  %1176 = vmatpush1.bf16.msra.mxu0 %v1158
  %1177 = vmatprep.subr.bf16.mxu0 0
  %1178 = vmatpush1.bf16.msra.mxu0 %v1159
  %1179 = vmatprep.subr.bf16.mxu0 0
  %1180 = vmatpush1.bf16.msra.mxu0 %v1160
  %1181 = vmatprep.subr.bf16.mxu0 0
  %1182 = vmatpush1.bf16.msra.mxu0 %v1161
  %1183 = vmatprep.subr.bf16.mxu0 0
  %1184 = vmatpush1.bf16.msra.mxu0 %v1162
  %1185 = vmatprep.subr.bf16.mxu0 0
  %1186 = vmatpush1.bf16.msra.mxu0 %v1163
  %1187 = vmatprep.subr.bf16.mxu0 0
  %1188 = vmatpush1.bf16.msra.mxu0 %v1164
  %1189 = vmatprep.subr.bf16.mxu0 0
  %1190 = vmatpush1.bf16.msra.mxu0 0
  %1191 = vmatprep.subr.bf16.mxu0 0
  %1192 = vmatpush1.bf16.msra.mxu0 0
  %1193 = vmatprep.subr.bf16.mxu0 0
  %1194 = vmatpush1.bf16.msra.mxu0 0
  %1195 = vmatprep.subr.bf16.mxu0 0
  %1196 = vmatpush1.bf16.msra.mxu0 0
  %1197 = vmatprep.subr.bf16.mxu0 0
  %1198 = vmatpush1.bf16.msra.mxu0 0
  %1199 = vmatprep.subr.bf16.mxu0 0
  %1200 = vmatpush1.bf16.msra.mxu0 0
  %1201 = vmatprep.subr.bf16.mxu0 0
  %1202 = vmatpush1.bf16.msra.mxu0 0
  %1203 = vmatprep.subr.bf16.mxu0 0
  %1204 = vmatpush1.bf16.msra.mxu0 0
  %1205 = vmatprep.mubr.bf16.mxu0 0
  %1206 = vmatmul.mubr.bf16.gmra.mrb[0].mxu0 %v1108
  %v1207 = vpop.f32.mrb[0].mxu0
  %v1208 = vadd.f32 %v1040, %v1207
  %v1209 = vpop.f32.mrb[0].mxu0
  %v1210 = vpop.f32.mrb[0].mxu0
  %v1211 = vpop.f32.mrb[0].mxu0
  %1212 = vdwg.mxu0
  %v1213 = vld [vmem:[%s8] sm:$0x1]
  %v1215 = vlaneseq
  %v1216 = vshrl.u32 %v1215, 7
  %v1217 = vsub.s32 0, %v1216
  %v1218 = vrot.slane %v1213, %v1217
  %v1220 = vadd.f32 %v1208, %v1218
  %v1221 = vmax.f32 %v1220, 0.0
  %v1222 = vpack.c.bf16 %v1221, %v1221
  %v1223 = vld [vmem:[%s9] sm:$0xff]
  %v1224 = vld [vmem:[%s9 + $0x8] sm:$0xff]
  %v1225 = vld [vmem:[%s9 + $0x10] sm:$0xff]
  %v1226 = vld [vmem:[%s9 + $0x18] sm:$0xff]
  %v1227 = vld [vmem:[%s9 + $0x20] sm:$0xff]
  %v1228 = vld [vmem:[%s9 + $0x28] sm:$0xff]
  %v1229 = vld [vmem:[%s9 + $0x30] sm:$0xff]
  %v1230 = vld [vmem:[%s9 + $0x38] sm:$0xff]
  %v1231 = vld [vmem:[%s9 + $0x40] sm:$0xff]
  %v1232 = vld [vmem:[%s9 + $0x48] sm:$0xff]
  %v1233 = vld [vmem:[%s9 + $0x50] sm:$0xff]
  %v1234 = vld [vmem:[%s9 + $0x58] sm:$0xff]
  %v1235 = vld [vmem:[%s9 + $0x60] sm:$0xff]
  %v1236 = vld [vmem:[%s9 + $0x68] sm:$0xff]
  %v1237 = vld [vmem:[%s9 + $0x70] sm:$0xff]
  %v1238 = vld [vmem:[%s9 + $0x78] sm:$0xff]
  %v1239 = vld [vmem:[%s9 + $0x80] sm:$0xff]
  %v1240 = vld [vmem:[%s9 + $0x88] sm:$0xff]
  %v1241 = vld [vmem:[%s9 + $0x90] sm:$0xff]
  %v1242 = vld [vmem:[%s9 + $0x98] sm:$0xff]
  %v1243 = vld [vmem:[%s9 + $0xa0] sm:$0xff]
  %v1244 = vld [vmem:[%s9 + $0xa8] sm:$0xff]
  %v1245 = vld [vmem:[%s9 + $0xb0] sm:$0xff]
  %v1246 = vld [vmem:[%s9 + $0xb8] sm:$0xff]
  %v1247 = vld [vmem:[%s9 + $0xc0] sm:$0xff]
  %v1248 = vld [vmem:[%s9 + $0xc8] sm:$0xff]
  %v1249 = vld [vmem:[%s9 + $0xd0] sm:$0xff]
  %v1250 = vld [vmem:[%s9 + $0xd8] sm:$0xff]
  %v1251 = vld [vmem:[%s9 + $0xe0] sm:$0xff]
  %v1252 = vld [vmem:[%s9 + $0xe8] sm:$0xff]
  %v1253 = vld [vmem:[%s9 + $0xf0] sm:$0xff]
  %v1254 = vld [vmem:[%s9 + $0xf8] sm:$0xff]
  %v1255 = vld [vmem:[%s9 + $0x100] sm:$0xff]
  %v1256 = vld [vmem:[%s9 + $0x108] sm:$0xff]
  %v1257 = vld [vmem:[%s9 + $0x110] sm:$0xff]
  %v1258 = vld [vmem:[%s9 + $0x118] sm:$0xff]
  %v1259 = vld [vmem:[%s9 + $0x120] sm:$0xff]
  %v1260 = vld [vmem:[%s9 + $0x128] sm:$0xff]
  %v1261 = vld [vmem:[%s9 + $0x130] sm:$0xff]
  %v1262 = vld [vmem:[%s9 + $0x138] sm:$0xff]
  %v1263 = vld [vmem:[%s9 + $0x140] sm:$0xff]
  %v1264 = vld [vmem:[%s9 + $0x148] sm:$0xff]
  %v1265 = vld [vmem:[%s9 + $0x150] sm:$0xff]
  %v1266 = vld [vmem:[%s9 + $0x158] sm:$0xff]
  %v1267 = vld [vmem:[%s9 + $0x160] sm:$0xff]
  %v1268 = vld [vmem:[%s9 + $0x168] sm:$0xff]
  %v1269 = vld [vmem:[%s9 + $0x170] sm:$0xff]
  %v1270 = vld [vmem:[%s9 + $0x178] sm:$0xff]
  %v1271 = vld [vmem:[%s9 + $0x180] sm:$0xff]
  %v1272 = vld [vmem:[%s9 + $0x188] sm:$0xff]
  %v1273 = vld [vmem:[%s9 + $0x190] sm:$0xff]
  %v1274 = vld [vmem:[%s9 + $0x198] sm:$0xff]
  %v1275 = vld [vmem:[%s9 + $0x1a0] sm:$0xff]
  %v1276 = vld [vmem:[%s9 + $0x1a8] sm:$0xff]
  %v1277 = vld [vmem:[%s9 + $0x1b0] sm:$0xff]
  %v1278 = vld [vmem:[%s9 + $0x1b8] sm:$0xff]
  %v1279 = vld [vmem:[%s9 + $0x1c0] sm:$0xff]
  %v1280 = vld [vmem:[%s9 + $0x1c8] sm:$0xff]
  %v1281 = vld [vmem:[%s9 + $0x1d0] sm:$0xff]
  %v1282 = vld [vmem:[%s9 + $0x1d8] sm:$0xff]
  %v1283 = vld [vmem:[%s9 + $0x1e0] sm:$0xff]
  %v1284 = vld [vmem:[%s9 + $0x1e8] sm:$0xff]
  %v1285 = vld [vmem:[%s9 + $0x1f0] sm:$0xff]
  %v1286 = vld [vmem:[%s9 + $0x1f8] sm:$0xff]
  %v1287 = vld [vmem:[%s10] sm:$0xff]
  %v1289 = vlaneseq
  %v1290 = vshrl.u32 %v1289, 7
  %v1291 = vsub.s32 0, %v1290
  %v1292 = vrot.slane %v1287, %v1291
  %v1293 = vlaneseq
  %v1294 = vshrl.u32 %v1293, 7
  %v1295 = vsub.s32 1, %v1294
  %v1296 = vrot.slane %v1287, %v1295
  %v1297 = vlaneseq
  %v1298 = vshrl.u32 %v1297, 7
  %v1299 = vsub.s32 2, %v1298
  %v1300 = vrot.slane %v1287, %v1299
  %v1301 = vlaneseq
  %v1302 = vshrl.u32 %v1301, 7
  %v1303 = vsub.s32 3, %v1302
  %v1304 = vrot.slane %v1287, %v1303
  %v1305 = vlaneseq
  %v1306 = vshrl.u32 %v1305, 7
  %v1307 = vsub.s32 4, %v1306
  %v1308 = vrot.slane %v1287, %v1307
  %v1309 = vlaneseq
  %v1310 = vshrl.u32 %v1309, 7
  %v1311 = vsub.s32 5, %v1310
  %v1312 = vrot.slane %v1287, %v1311
  %v1313 = vlaneseq
  %v1314 = vshrl.u32 %v1313, 7
  %v1315 = vsub.s32 6, %v1314
  %v1316 = vrot.slane %v1287, %v1315
  %v1317 = vlaneseq
  %v1318 = vshrl.u32 %v1317, 7
  %v1319 = vsub.s32 7, %v1318
  %v1320 = vrot.slane %v1287, %v1319
  %v1393 = vunpack.c.l.b16 %v1223
  %v1394 = vunpack.c.h.b16 %v1223
  %v1395 = vunpack.c.l.b16 %v1224
  %v1396 = vunpack.c.h.b16 %v1224
  %v1397 = vunpack.c.l.b16 %v1225
  %v1398 = vunpack.c.h.b16 %v1225
  %v1399 = vunpack.c.l.b16 %v1226
  %v1400 = vunpack.c.h.b16 %v1226
  %v1401 = vunpack.c.l.b16 %v1227
  %v1402 = vunpack.c.h.b16 %v1227
  %v1403 = vunpack.c.l.b16 %v1228
  %v1404 = vunpack.c.h.b16 %v1228
  %v1405 = vunpack.c.l.b16 %v1229
  %v1406 = vunpack.c.h.b16 %v1229
  %v1407 = vunpack.c.l.b16 %v1230
  %v1408 = vunpack.c.h.b16 %v1230
  %v1409 = vunpack.c.l.b16 %v1231
  %v1410 = vunpack.c.h.b16 %v1231
  %v1411 = vunpack.c.l.b16 %v1232
  %v1412 = vunpack.c.h.b16 %v1232
  %v1413 = vunpack.c.l.b16 %v1233
  %v1414 = vunpack.c.h.b16 %v1233
  %v1415 = vunpack.c.l.b16 %v1234
  %v1416 = vunpack.c.h.b16 %v1234
  %v1417 = vunpack.c.l.b16 %v1235
  %v1418 = vunpack.c.h.b16 %v1235
  %v1419 = vunpack.c.l.b16 %v1236
  %v1420 = vunpack.c.h.b16 %v1236
  %v1421 = vunpack.c.l.b16 %v1237
  %v1422 = vunpack.c.h.b16 %v1237
  %v1423 = vunpack.c.l.b16 %v1238
  %v1424 = vunpack.c.h.b16 %v1238
  %v1425 = vunpack.c.l.b16 %v1239
  %v1426 = vunpack.c.h.b16 %v1239
  %v1427 = vunpack.c.l.b16 %v1240
  %v1428 = vunpack.c.h.b16 %v1240
  %v1429 = vunpack.c.l.b16 %v1241
  %v1430 = vunpack.c.h.b16 %v1241
  %v1431 = vunpack.c.l.b16 %v1242
  %v1432 = vunpack.c.h.b16 %v1242
  %v1433 = vunpack.c.l.b16 %v1243
  %v1434 = vunpack.c.h.b16 %v1243
  %v1435 = vunpack.c.l.b16 %v1244
  %v1436 = vunpack.c.h.b16 %v1244
  %v1437 = vunpack.c.l.b16 %v1245
  %v1438 = vunpack.c.h.b16 %v1245
  %v1439 = vunpack.c.l.b16 %v1246
  %v1440 = vunpack.c.h.b16 %v1246
  %v1441 = vunpack.c.l.b16 %v1247
  %v1442 = vunpack.c.h.b16 %v1247
  %v1443 = vunpack.c.l.b16 %v1248
  %v1444 = vunpack.c.h.b16 %v1248
  %v1445 = vunpack.c.l.b16 %v1249
  %v1446 = vunpack.c.h.b16 %v1249
  %v1447 = vunpack.c.l.b16 %v1250
  %v1448 = vunpack.c.h.b16 %v1250
  %v1449 = vunpack.c.l.b16 %v1251
  %v1450 = vunpack.c.h.b16 %v1251
  %v1451 = vunpack.c.l.b16 %v1252
  %v1452 = vunpack.c.h.b16 %v1252
  %v1453 = vunpack.c.l.b16 %v1253
  %v1454 = vunpack.c.h.b16 %v1253
  %v1455 = vunpack.c.l.b16 %v1254
  %v1456 = vunpack.c.h.b16 %v1254
  %v1457 = vunpack.c.l.b16 %v1255
  %v1458 = vunpack.c.h.b16 %v1255
  %v1459 = vunpack.c.l.b16 %v1256
  %v1460 = vunpack.c.h.b16 %v1256
  %v1461 = vunpack.c.l.b16 %v1257
  %v1462 = vunpack.c.h.b16 %v1257
  %v1463 = vunpack.c.l.b16 %v1258
  %v1464 = vunpack.c.h.b16 %v1258
  %v1465 = vunpack.c.l.b16 %v1259
  %v1466 = vunpack.c.h.b16 %v1259
  %v1467 = vunpack.c.l.b16 %v1260
  %v1468 = vunpack.c.h.b16 %v1260
  %v1469 = vunpack.c.l.b16 %v1261
  %v1470 = vunpack.c.h.b16 %v1261
  %v1471 = vunpack.c.l.b16 %v1262
  %v1472 = vunpack.c.h.b16 %v1262
  %v1473 = vunpack.c.l.b16 %v1263
  %v1474 = vunpack.c.h.b16 %v1263
  %v1475 = vunpack.c.l.b16 %v1264
  %v1476 = vunpack.c.h.b16 %v1264
  %v1477 = vunpack.c.l.b16 %v1265
  %v1478 = vunpack.c.h.b16 %v1265
  %v1479 = vunpack.c.l.b16 %v1266
  %v1480 = vunpack.c.h.b16 %v1266
  %v1481 = vunpack.c.l.b16 %v1267
  %v1482 = vunpack.c.h.b16 %v1267
  %v1483 = vunpack.c.l.b16 %v1268
  %v1484 = vunpack.c.h.b16 %v1268
  %v1485 = vunpack.c.l.b16 %v1269
  %v1486 = vunpack.c.h.b16 %v1269
  %v1487 = vunpack.c.l.b16 %v1270
  %v1488 = vunpack.c.h.b16 %v1270
  %v1489 = vunpack.c.l.b16 %v1271
  %v1490 = vunpack.c.h.b16 %v1271
  %v1491 = vunpack.c.l.b16 %v1272
  %v1492 = vunpack.c.h.b16 %v1272
  %v1493 = vunpack.c.l.b16 %v1273
  %v1494 = vunpack.c.h.b16 %v1273
  %v1495 = vunpack.c.l.b16 %v1274
  %v1496 = vunpack.c.h.b16 %v1274
  %v1497 = vunpack.c.l.b16 %v1275
  %v1498 = vunpack.c.h.b16 %v1275
  %v1499 = vunpack.c.l.b16 %v1276
  %v1500 = vunpack.c.h.b16 %v1276
  %v1501 = vunpack.c.l.b16 %v1277
  %v1502 = vunpack.c.h.b16 %v1277
  %v1503 = vunpack.c.l.b16 %v1278
  %v1504 = vunpack.c.h.b16 %v1278
  %v1505 = vunpack.c.l.b16 %v1279
  %v1506 = vunpack.c.h.b16 %v1279
  %v1507 = vunpack.c.l.b16 %v1280
  %v1508 = vunpack.c.h.b16 %v1280
  %v1509 = vunpack.c.l.b16 %v1281
  %v1510 = vunpack.c.h.b16 %v1281
  %v1511 = vunpack.c.l.b16 %v1282
  %v1512 = vunpack.c.h.b16 %v1282
  %v1513 = vunpack.c.l.b16 %v1283
  %v1514 = vunpack.c.h.b16 %v1283
  %v1515 = vunpack.c.l.b16 %v1284
  %v1516 = vunpack.c.h.b16 %v1284
  %v1517 = vunpack.c.l.b16 %v1285
  %v1518 = vunpack.c.h.b16 %v1285
  %v1519 = vunpack.c.l.b16 %v1286
  %v1520 = vunpack.c.h.b16 %v1286
  %v1521 = vpack.c.b16 %v1401, %v1393
  %v1522 = vpack.c.b16 %v1402, %v1394
  %v1523 = vpack.c.b16 %v1403, %v1395
  %v1524 = vpack.c.b16 %v1404, %v1396
  %v1525 = vpack.c.b16 %v1405, %v1397
  %v1526 = vpack.c.b16 %v1406, %v1398
  %v1527 = vpack.c.b16 %v1407, %v1399
  %v1528 = vpack.c.b16 %v1408, %v1400
  %v1529 = vpack.c.b16 %v1417, %v1409
  %v1530 = vpack.c.b16 %v1418, %v1410
  %v1531 = vpack.c.b16 %v1419, %v1411
  %v1532 = vpack.c.b16 %v1420, %v1412
  %v1533 = vpack.c.b16 %v1421, %v1413
  %v1534 = vpack.c.b16 %v1422, %v1414
  %v1535 = vpack.c.b16 %v1423, %v1415
  %v1536 = vpack.c.b16 %v1424, %v1416
  %v1537 = vpack.c.b16 %v1433, %v1425
  %v1538 = vpack.c.b16 %v1434, %v1426
  %v1539 = vpack.c.b16 %v1435, %v1427
  %v1540 = vpack.c.b16 %v1436, %v1428
  %v1541 = vpack.c.b16 %v1437, %v1429
  %v1542 = vpack.c.b16 %v1438, %v1430
  %v1543 = vpack.c.b16 %v1439, %v1431
  %v1544 = vpack.c.b16 %v1440, %v1432
  %v1545 = vpack.c.b16 %v1449, %v1441
  %v1546 = vpack.c.b16 %v1450, %v1442
  %v1547 = vpack.c.b16 %v1451, %v1443
  %v1548 = vpack.c.b16 %v1452, %v1444
  %v1549 = vpack.c.b16 %v1453, %v1445
  %v1550 = vpack.c.b16 %v1454, %v1446
  %v1551 = vpack.c.b16 %v1455, %v1447
  %v1552 = vpack.c.b16 %v1456, %v1448
  %v1553 = vpack.c.b16 %v1465, %v1457
  %v1554 = vpack.c.b16 %v1466, %v1458
  %v1555 = vpack.c.b16 %v1467, %v1459
  %v1556 = vpack.c.b16 %v1468, %v1460
  %v1557 = vpack.c.b16 %v1469, %v1461
  %v1558 = vpack.c.b16 %v1470, %v1462
  %v1559 = vpack.c.b16 %v1471, %v1463
  %v1560 = vpack.c.b16 %v1472, %v1464
  %v1561 = vpack.c.b16 %v1481, %v1473
  %v1562 = vpack.c.b16 %v1482, %v1474
  %v1563 = vpack.c.b16 %v1483, %v1475
  %v1564 = vpack.c.b16 %v1484, %v1476
  %v1565 = vpack.c.b16 %v1485, %v1477
  %v1566 = vpack.c.b16 %v1486, %v1478
  %v1567 = vpack.c.b16 %v1487, %v1479
  %v1568 = vpack.c.b16 %v1488, %v1480
  %v1569 = vpack.c.b16 %v1497, %v1489
  %v1570 = vpack.c.b16 %v1498, %v1490
  %v1571 = vpack.c.b16 %v1499, %v1491
  %v1572 = vpack.c.b16 %v1500, %v1492
  %v1573 = vpack.c.b16 %v1501, %v1493
  %v1574 = vpack.c.b16 %v1502, %v1494
  %v1575 = vpack.c.b16 %v1503, %v1495
  %v1576 = vpack.c.b16 %v1504, %v1496
  %v1577 = vpack.c.b16 %v1513, %v1505
  %v1578 = vpack.c.b16 %v1514, %v1506
  %v1579 = vpack.c.b16 %v1515, %v1507
  %v1580 = vpack.c.b16 %v1516, %v1508
  %v1581 = vpack.c.b16 %v1517, %v1509
  %v1582 = vpack.c.b16 %v1518, %v1510
  %v1583 = vpack.c.b16 %v1519, %v1511
  %v1584 = vpack.c.b16 %v1520, %v1512
  %1649 = vmatprep.subr.bf16.mxu0 %v1522
  %1650 = vmatpush1.bf16.msra.mxu0 %v1521
  %1651 = vmatprep.subr.bf16.mxu0 %v1530
  %1652 = vmatpush1.bf16.msra.mxu0 %v1529
  %1653 = vmatprep.subr.bf16.mxu0 %v1538
  %1654 = vmatpush1.bf16.msra.mxu0 %v1537
  %1655 = vmatprep.subr.bf16.mxu0 %v1546
  %1656 = vmatpush1.bf16.msra.mxu0 %v1545
  %1657 = vmatprep.subr.bf16.mxu0 %v1554
  %1658 = vmatpush1.bf16.msra.mxu0 %v1553
  %1659 = vmatprep.subr.bf16.mxu0 %v1562
  %1660 = vmatpush1.bf16.msra.mxu0 %v1561
  %1661 = vmatprep.subr.bf16.mxu0 %v1570
  %1662 = vmatpush1.bf16.msra.mxu0 %v1569
  %1663 = vmatprep.subr.bf16.mxu0 %v1578
  %1664 = vmatpush1.bf16.msra.mxu0 %v1577
  %1665 = vmatprep.subr.bf16.mxu0 0
  %1666 = vmatpush1.bf16.msra.mxu0 0
  %1667 = vmatprep.subr.bf16.mxu0 0
  %1668 = vmatpush1.bf16.msra.mxu0 0
  %1669 = vmatprep.subr.bf16.mxu0 0
  %1670 = vmatpush1.bf16.msra.mxu0 0
  %1671 = vmatprep.subr.bf16.mxu0 0
  %1672 = vmatpush1.bf16.msra.mxu0 0
  %1673 = vmatprep.subr.bf16.mxu0 0
  %1674 = vmatpush1.bf16.msra.mxu0 0
  %1675 = vmatprep.subr.bf16.mxu0 0
  %1676 = vmatpush1.bf16.msra.mxu0 0
  %1677 = vmatprep.subr.bf16.mxu0 0
  %1678 = vmatpush1.bf16.msra.mxu0 0
  %1679 = vmatprep.subr.bf16.mxu0 0
  %1680 = vmatpush1.bf16.msra.mxu0 0
  %1681 = vmatprep.mubr.bf16.mxu0 0
  %1682 = vmatmul.mubr.bf16.gmra.mrb[0].mxu0 %v1222
  %v1683 = vpop.f32.mrb[0].mxu0
  %v1684 = vadd.f32 %v1292, %v1683
  %v1685 = vpop.f32.mrb[0].mxu0
  %v1686 = vadd.f32 %v1296, %v1685
  %v1687 = vpop.f32.mrb[0].mxu0
  %v1688 = vpop.f32.mrb[0].mxu0
  %1689 = vdwg.mxu0
  %1690 = vmatprep.subr.bf16.mxu0 %v1524
  %1691 = vmatpush1.bf16.msra.mxu0 %v1523
  %1692 = vmatprep.subr.bf16.mxu0 %v1532
  %1693 = vmatpush1.bf16.msra.mxu0 %v1531
  %1694 = vmatprep.subr.bf16.mxu0 %v1540
  %1695 = vmatpush1.bf16.msra.mxu0 %v1539
  %1696 = vmatprep.subr.bf16.mxu0 %v1548
  %1697 = vmatpush1.bf16.msra.mxu0 %v1547
  %1698 = vmatprep.subr.bf16.mxu0 %v1556
  %1699 = vmatpush1.bf16.msra.mxu0 %v1555
  %1700 = vmatprep.subr.bf16.mxu0 %v1564
  %1701 = vmatpush1.bf16.msra.mxu0 %v1563
  %1702 = vmatprep.subr.bf16.mxu0 %v1572
  %1703 = vmatpush1.bf16.msra.mxu0 %v1571
  %1704 = vmatprep.subr.bf16.mxu0 %v1580
  %1705 = vmatpush1.bf16.msra.mxu0 %v1579
  %1706 = vmatprep.subr.bf16.mxu0 0
  %1707 = vmatpush1.bf16.msra.mxu0 0
  %1708 = vmatprep.subr.bf16.mxu0 0
  %1709 = vmatpush1.bf16.msra.mxu0 0
  %1710 = vmatprep.subr.bf16.mxu0 0
  %1711 = vmatpush1.bf16.msra.mxu0 0
  %1712 = vmatprep.subr.bf16.mxu0 0
  %1713 = vmatpush1.bf16.msra.mxu0 0
  %1714 = vmatprep.subr.bf16.mxu0 0
  %1715 = vmatpush1.bf16.msra.mxu0 0
  %1716 = vmatprep.subr.bf16.mxu0 0
  %1717 = vmatpush1.bf16.msra.mxu0 0
  %1718 = vmatprep.subr.bf16.mxu0 0
  %1719 = vmatpush1.bf16.msra.mxu0 0
  %1720 = vmatprep.subr.bf16.mxu0 0
  %1721 = vmatpush1.bf16.msra.mxu0 0
  %1722 = vmatprep.mubr.bf16.mxu0 0
  %1723 = vmatmul.mubr.bf16.gmra.mrb[0].mxu0 %v1222
  %v1724 = vpop.f32.mrb[0].mxu0
  %v1725 = vadd.f32 %v1300, %v1724
  %v1726 = vpop.f32.mrb[0].mxu0
  %v1727 = vadd.f32 %v1304, %v1726
  %v1728 = vpop.f32.mrb[0].mxu0
  %v1729 = vpop.f32.mrb[0].mxu0
  %1730 = vdwg.mxu0
  %1731 = vmatprep.subr.bf16.mxu0 %v1526
  %1732 = vmatpush1.bf16.msra.mxu0 %v1525
  %1733 = vmatprep.subr.bf16.mxu0 %v1534
  %1734 = vmatpush1.bf16.msra.mxu0 %v1533
  %1735 = vmatprep.subr.bf16.mxu0 %v1542
  %1736 = vmatpush1.bf16.msra.mxu0 %v1541
  %1737 = vmatprep.subr.bf16.mxu0 %v1550
  %1738 = vmatpush1.bf16.msra.mxu0 %v1549
  %1739 = vmatprep.subr.bf16.mxu0 %v1558
  %1740 = vmatpush1.bf16.msra.mxu0 %v1557
  %1741 = vmatprep.subr.bf16.mxu0 %v1566
  %1742 = vmatpush1.bf16.msra.mxu0 %v1565
  %1743 = vmatprep.subr.bf16.mxu0 %v1574
  %1744 = vmatpush1.bf16.msra.mxu0 %v1573
  %1745 = vmatprep.subr.bf16.mxu0 %v1582
  %1746 = vmatpush1.bf16.msra.mxu0 %v1581
  %1747 = vmatprep.subr.bf16.mxu0 0
  %1748 = vmatpush1.bf16.msra.mxu0 0
  %1749 = vmatprep.subr.bf16.mxu0 0
  %1750 = vmatpush1.bf16.msra.mxu0 0
  %1751 = vmatprep.subr.bf16.mxu0 0
  %1752 = vmatpush1.bf16.msra.mxu0 0
  %1753 = vmatprep.subr.bf16.mxu0 0
  %1754 = vmatpush1.bf16.msra.mxu0 0
  %1755 = vmatprep.subr.bf16.mxu0 0
  %1756 = vmatpush1.bf16.msra.mxu0 0
  %1757 = vmatprep.subr.bf16.mxu0 0
  %1758 = vmatpush1.bf16.msra.mxu0 0
  %1759 = vmatprep.subr.bf16.mxu0 0
  %1760 = vmatpush1.bf16.msra.mxu0 0
  %1761 = vmatprep.subr.bf16.mxu0 0
  %1762 = vmatpush1.bf16.msra.mxu0 0
  %1763 = vmatprep.mubr.bf16.mxu0 0
  %1764 = vmatmul.mubr.bf16.gmra.mrb[0].mxu0 %v1222
  %v1765 = vpop.f32.mrb[0].mxu0
  %v1766 = vadd.f32 %v1308, %v1765
  %v1767 = vpop.f32.mrb[0].mxu0
  %v1768 = vadd.f32 %v1312, %v1767
  %v1769 = vpop.f32.mrb[0].mxu0
  %v1770 = vpop.f32.mrb[0].mxu0
  %1771 = vdwg.mxu0
  %1772 = vmatprep.subr.bf16.mxu0 %v1528
  %1773 = vmatpush1.bf16.msra.mxu0 %v1527
  %1774 = vmatprep.subr.bf16.mxu0 %v1536
  %1775 = vmatpush1.bf16.msra.mxu0 %v1535
  %1776 = vmatprep.subr.bf16.mxu0 %v1544
  %1777 = vmatpush1.bf16.msra.mxu0 %v1543
  %1778 = vmatprep.subr.bf16.mxu0 %v1552
  %1779 = vmatpush1.bf16.msra.mxu0 %v1551
  %1780 = vmatprep.subr.bf16.mxu0 %v1560
  %1781 = vmatpush1.bf16.msra.mxu0 %v1559
  %1782 = vmatprep.subr.bf16.mxu0 %v1568
  %1783 = vmatpush1.bf16.msra.mxu0 %v1567
  %1784 = vmatprep.subr.bf16.mxu0 %v1576
  %1785 = vmatpush1.bf16.msra.mxu0 %v1575
  %1786 = vmatprep.subr.bf16.mxu0 %v1584
  %1787 = vmatpush1.bf16.msra.mxu0 %v1583
  %1788 = vmatprep.subr.bf16.mxu0 0
  %1789 = vmatpush1.bf16.msra.mxu0 0
  %1790 = vmatprep.subr.bf16.mxu0 0
  %1791 = vmatpush1.bf16.msra.mxu0 0
  %1792 = vmatprep.subr.bf16.mxu0 0
  %1793 = vmatpush1.bf16.msra.mxu0 0
  %1794 = vmatprep.subr.bf16.mxu0 0
  %1795 = vmatpush1.bf16.msra.mxu0 0
  %1796 = vmatprep.subr.bf16.mxu0 0
  %1797 = vmatpush1.bf16.msra.mxu0 0
  %1798 = vmatprep.subr.bf16.mxu0 0
  %1799 = vmatpush1.bf16.msra.mxu0 0
  %1800 = vmatprep.subr.bf16.mxu0 0
  %1801 = vmatpush1.bf16.msra.mxu0 0
  %1802 = vmatprep.subr.bf16.mxu0 0
  %1803 = vmatpush1.bf16.msra.mxu0 0
  %1804 = vmatprep.mubr.bf16.mxu0 0
  %1805 = vmatmul.mubr.bf16.gmra.mrb[0].mxu0 %v1222
  %v1806 = vpop.f32.mrb[0].mxu0
  %v1807 = vadd.f32 %v1316, %v1806
  %v1808 = vpop.f32.mrb[0].mxu0
  %v1809 = vadd.f32 %v1320, %v1808
  %v1810 = vpop.f32.mrb[0].mxu0
  %v1811 = vpop.f32.mrb[0].mxu0
  %1812 = vdwg.mxu0
  %v1813 = vtanh.pop %v1684
  %v1814 = vtanh.pop %v1686
  %v1815 = vtanh.pop %v1725
  %v1816 = vtanh.pop %v1727
  %v1817 = vtanh.pop %v1766
  %v1818 = vtanh.pop %v1768
  %v1819 = vtanh.pop %v1807
  %v1820 = vtanh.pop %v1809
  %1821 = vst [vmem:[%s11] sm:$0xff] %v1813
  %1822 = vst [vmem:[%s11 + $0x8] sm:$0xff] %v1814
  %1823 = vst [vmem:[%s11 + $0x10] sm:$0xff] %v1815
  %1824 = vst [vmem:[%s11 + $0x18] sm:$0xff] %v1816
  %1825 = vst [vmem:[%s11 + $0x20] sm:$0xff] %v1817
  %1826 = vst [vmem:[%s11 + $0x28] sm:$0xff] %v1818
  %1827 = vst [vmem:[%s11 + $0x30] sm:$0xff] %v1819
  %1828 = vst [vmem:[%s11 + $0x38] sm:$0xff] %v1820
  // Predicated region
  $region46: #{_lambda_.1} parent=0 // pred_check
    _
  $region47: #{_lambda_.1} parent=0 // pred_check_branch
    %1830 = sbr.rel (0) target = $region49
  $region48: #{_lambda_.1} parent=0 // pred_region
    _
  $region49: #{_lambda_.1} parent=0 // pred_fallthru
    _
  // Predicated region
  $region50: #{_lambda_.1} parent=0 // pred_check
    _
  $region51: #{_lambda_.1} parent=0 // pred_check_branch
    %1832 = sbr.rel (0) target = $region53
  $region52: #{_lambda_.1} parent=0 // pred_region
    _
  $region53: #{_lambda_.1} parent=0 // pred_fallthru
    _
  // Predicated region
  $region54: #{_lambda_.1} parent=0 // pred_check
    _
  $region55: #{_lambda_.1} parent=0 // pred_check_branch
    %1834 = sbr.rel (0) target = $region57
  $region56: #{_lambda_.1} parent=0 // pred_region
    _
  $region57: #{_lambda_.1} parent=0 // pred_fallthru
    _
  // Predicated region
  $region58: #{_lambda_.1} parent=0 // pred_check
    _
  $region59: #{_lambda_.1} parent=0 // pred_check_branch
    %1836 = sbr.rel (0) target = $region61
  $region60: #{_lambda_.1} parent=0 // pred_region
    _
  $region61: #{_lambda_.1} parent=0 // pred_fallthru
    _

</llo_original>
